<compile_context>
chip_gen: v7x
topology: tpu7x:2x2x1
jax: 0.10.0
libtpu: 0.0.40
codegen_flags: <defaults>
</compile_context>

<pallas_src>
import jax
import jax.numpy as jnp
from jax.experimental import pallas as pl
from jax.experimental.pallas import tpu as pltpu


def _pointwise_conv_sigmoid_kernel(x_ref, w_ref, b_ref, o_ref):
    # x_ref: (1, Cin, tS)   w_ref: (Cout, Cin)   b_ref: (Cout, 1)
    # o_ref: (1, Cout, tS)
    acc = jnp.dot(w_ref[...], x_ref[0], preferred_element_type=jnp.float32)
    acc = acc + b_ref[...].astype(jnp.float32)
    o_ref[0] = jax.nn.sigmoid(acc).astype(o_ref.dtype)


def _pick_spatial_tile(S, Cin, Cout, itemsize, vmem_budget_bytes=8 * 1024 * 1024):
    """Largest multiple-of-128 spatial tile whose double-buffered input+output
    blocks stay within a conservative VMEM budget, then rebalanced so the
    tail padding is minimal."""
    per_col = 2 * itemsize * (Cin + Cout)            # 2x for double buffering
    max_ts = max(128, (vmem_budget_bytes // per_col) // 128 * 128)
    s_lane = pl.cdiv(S, 128) * 128                   # S rounded up to lane width
    n_tiles = pl.cdiv(s_lane, max_ts)
    tile_s = pl.cdiv(s_lane // 128, n_tiles) * 128   # balanced tiles, pad < 128*n_tiles
    return int(tile_s)


def output_transition_forward(x, w, b, *, tile_s=None):
    """sigmoid(Conv3d(kernel_size=1)(x)) via a Pallas channel matmul.

    x: [N, Cin, D, H, W]    (PyTorch NCDHW)
    w: [Cout, Cin, 1, 1, 1] (PyTorch OIDHW)
    b: [Cout]
    returns: [N, Cout, D, H, W]
    """
    N, Cin, D, H, W = x.shape
    Cout = w.shape[0]
    S = D * H * W
    itemsize = jnp.dtype(x.dtype).itemsize

    # free reshapes (contiguous), no transposes needed for a 1x1x1 conv
    x3 = x.reshape(N, Cin, S)
    w2 = w.reshape(Cout, Cin).astype(x.dtype)
    b2 = b.reshape(Cout, 1).astype(jnp.float32)

    if tile_s is None:
        tile_s = _pick_spatial_tile(S, Cin, Cout, itemsize)
    n_tiles = pl.cdiv(S, tile_s)
    S_pad = n_tiles * tile_s
    if S_pad != S:
        x3 = jnp.pad(x3, ((0, 0), (0, 0), (0, S_pad - S)))

    cost = pl.CostEstimate(
        flops=2 * N * S_pad * Cin * Cout,
        transcendentals=N * S_pad * Cout,
        bytes_accessed=(N * Cin * S_pad + Cout * Cin) * itemsize
        + Cout * 4
        + N * Cout * S_pad * itemsize,
    )

    out3 = pl.pallas_call(
        _pointwise_conv_sigmoid_kernel,
        out_shape=jax.ShapeDtypeStruct((N, Cout, S_pad), x.dtype),
        grid_spec=pltpu.PrefetchScalarGridSpec(
            num_scalar_prefetch=0,
            grid=(N, n_tiles),
            in_specs=[
                pl.BlockSpec((1, Cin, tile_s), lambda n, s: (n, 0, s)),   # x tile
                pl.BlockSpec((Cout, Cin), lambda n, s: (0, 0)),           # weight (resident)
                pl.BlockSpec((Cout, 1), lambda n, s: (0, 0)),             # bias (resident)
            ],
            out_specs=pl.BlockSpec((1, Cout, tile_s), lambda n, s: (n, 0, s)),
        ),
        compiler_params=pltpu.CompilerParams(
            dimension_semantics=("parallel", "parallel"),
            vmem_limit_bytes=32 * 1024 * 1024,
        ),
        cost_estimate=cost,
    )(x3, w2, b2)

    if S_pad != S:
        out3 = out3[:, :, :S]
    return out3.reshape(N, Cout, D, H, W)


if __name__ == "__main__":
    key = jax.random.PRNGKey(0)
    kx, kw, kb = jax.random.split(key, 3)

    # OutputTransition(inChans=4, outChans=2) on a [2, 4, 16, 16, 16] volume
    N, Cin, Cout, D, H, W = 2, 4, 2, 16, 16, 16
    x = jax.random.normal(kx, (N, Cin, D, H, W), dtype=jnp.float32)
    w = 0.1 * jax.random.normal(kw, (Cout, Cin, 1, 1, 1), dtype=jnp.float32)
    b = 0.1 * jax.random.normal(kb, (Cout,), dtype=jnp.float32)

    out = output_transition_forward(x, w, b)
    out = jax.block_until_ready(out)

    # correctness check vs XLA 1x1x1 conv + bias + sigmoid
    ref = jax.lax.conv_general_dilated(
        x, w,
        window_strides=(1, 1, 1),
        padding=((0, 0), (0, 0), (0, 0)),
        dimension_numbers=("NCDHW", "OIDHW", "NCDHW"),
    )
    ref = jax.nn.sigmoid(ref + b.reshape(1, Cout, 1, 1, 1))
    assert out.shape == ref.shape, (out.shape, ref.shape)
    assert jnp.allclose(out, ref, rtol=1e-4, atol=1e-5), float(
        jnp.max(jnp.abs(out - ref))
    )

    print("KERNEL_OK")
</pallas_src>

<mosaic_0001>
module attributes {stable_mosaic.version = 11 : i64} {
  func.func @_pointwise_conv_sigmoid_kernel(%arg0: i32, %arg1: i32, %arg2: memref<1x4x4096xf32, #tpu.memory_space<vmem>>, %arg3: memref<2x4xf32, #tpu.memory_space<vmem>>, %arg4: memref<2x1xf32, #tpu.memory_space<vmem>>, %arg5: memref<1x2x4096xf32, #tpu.memory_space<vmem>>) attributes {dimension_semantics = [#tpu.dimension_semantics<parallel>, #tpu.dimension_semantics<parallel>], iteration_bounds = array<i64: 2, 1>, scalar_prefetch = 0 : i64, scratch_operands = 0 : i64, tpu.core_type = #tpu.core_type<tc>, window_params = [{transform_indices = @transform_0, window_bounds = array<i64: 1, 4, 4096>}, {pipeline_mode = #tpu.pipeline_mode<synchronous>, transform_indices = @transform_1, window_bounds = array<i64: 2, 4>}, {pipeline_mode = #tpu.pipeline_mode<synchronous>, transform_indices = @transform_2, window_bounds = array<i64: 2, 1>}, {transform_indices = @transform_3, window_bounds = array<i64: 1, 2, 4096>}]} {
    %c0 = arith.constant 0 : index
    %c0_0 = arith.constant 0 : index
    %0 = vector.load %arg3[%c0, %c0_0] : memref<2x4xf32, #tpu.memory_space<vmem>>, vector<2x4xf32>
    %c0_1 = arith.constant 0 : index
    %c0_2 = arith.constant 0 : index
    %c0_3 = arith.constant 0 : index
    %1 = vector.load %arg2[%c0_1, %c0_2, %c0_3] : memref<1x4x4096xf32, #tpu.memory_space<vmem>>, vector<1x4x4096xf32>
    %2 = vector.shape_cast %1 : vector<1x4x4096xf32> to vector<4x4096xf32>
    %cst = arith.constant dense<0.000000e+00> : vector<2x4096xf32>
    %3 = tpu.matmul %0, %2, %cst {dimension_numbers = #tpu.dot_dimension_numbers<[1], [0], [0], [1], [0, 0, 1, 1], [], []>} : vector<2x4xf32>, vector<4x4096xf32>, vector<2x4096xf32> -> vector<2x4096xf32>
    %c0_4 = arith.constant 0 : index
    %c0_5 = arith.constant 0 : index
    %4 = vector.load %arg4[%c0_4, %c0_5] : memref<2x1xf32, #tpu.memory_space<vmem>>, vector<2x1xf32>
    %5 = vector.broadcast %4 : vector<2x1xf32> to vector<2x4096xf32>
    %6 = arith.addf %3, %5 : vector<2x4096xf32>
    %7 = arith.negf %6 : vector<2x4096xf32>
    %8 = math.exp %7 : vector<2x4096xf32>
    %cst_6 = arith.constant 1.000000e+00 : f32
    %9 = vector.broadcast %cst_6 : f32 to vector<2x4096xf32>
    %10 = arith.addf %9, %8 : vector<2x4096xf32>
    %11 = arith.divf %9, %10 : vector<2x4096xf32>
    %c0_7 = arith.constant 0 : index
    %c0_8 = arith.constant 0 : index
    %c0_9 = arith.constant 0 : index
    %12 = vector.load %arg5[%c0_7, %c0_8, %c0_9] : memref<1x2x4096xf32, #tpu.memory_space<vmem>>, vector<1x2x4096xf32>
    %13 = vector.shape_cast %12 : vector<1x2x4096xf32> to vector<2x4096xf32>
    %14 = vector.shape_cast %11 : vector<2x4096xf32> to vector<1x2x4096xf32>
    tpu.vector_store %arg5[%c0_7, %c0_8, %c0_9], %14 {strides = array<i32>} : memref<1x2x4096xf32, #tpu.memory_space<vmem>>, vector<1x2x4096xf32>,
    return
  }
  func.func @transform_0(%arg0: i32, %arg1: i32) -> (i32, i32, i32) {
    %c0_i32 = arith.constant 0 : i32
    %c0_i32_0 = arith.constant 0 : i32
    return %arg0, %c0_i32, %arg1 : i32, i32, i32
  }
  func.func @transform_1(%arg0: i32, %arg1: i32) -> (i32, i32) {
    %c0_i32 = arith.constant 0 : i32
    %c0_i32_0 = arith.constant 0 : i32
    %c0_i32_1 = arith.constant 0 : i32
    return %c0_i32, %c0_i32_0 : i32, i32
  }
  func.func @transform_2(%arg0: i32, %arg1: i32) -> (i32, i32) {
    %c0_i32 = arith.constant 0 : i32
    %c0_i32_0 = arith.constant 0 : i32
    %c0_i32_1 = arith.constant 0 : i32
    return %c0_i32, %c0_i32_0 : i32, i32
  }
  func.func @transform_3(%arg0: i32, %arg1: i32) -> (i32, i32, i32) {
    %c0_i32 = arith.constant 0 : i32
    %c0_i32_0 = arith.constant 0 : i32
    return %arg0, %c0_i32, %arg1 : i32, i32, i32
  }
}

</mosaic_0001>

<llo_original>
// kernel: tpu_custom_call.1
$region0: #{tpu_custom_call.1}
  #allocation0 [shape = 'u32[]', space=smem, size = 0x4, offset = 0x4, fixed_abs, tag = 'smem constant byte address 0x4 - core index']
  #allocation1 [shape = 'u32[144,128]{1,0:T(1,128)}', space=vmem, size = 0x12000, scoped, tag = 'internal scratch']
  %s0 = inlined_call_operand.hbm [shape: f32[2,4,4096], index: 0, kind: input, shape index: {}]
  %s1 = inlined_call_operand.vmem [shape: f32[2,4], index: 1, kind: input, shape index: {}]
  %s2 = inlined_call_operand.vmem [shape: f32[2,1], index: 2, kind: input, shape index: {}]
  %s3 = inlined_call_operand.hbm [shape: f32[2,2,4096], index: 3, kind: output, shape index: {}]
  %s4 = sld [smem:[#allocation0]]
  $region49: #{tpu_custom_call.1} parent=0
    _
  %s6 = ssub.s32 1, %s4
  %s7 = scalar_select 0, %s6, %s4
  $region1: #{tpu_custom_call.1} parent=0
    #allocation2 [shape = 'u8[131072]{0}', space=vmem, size = 0x20000, scoped, tag = 'input window, operand 0']
    #allocation3 [shape = 's32[2]{0}', space=sflag, size = 0x8, scoped, tag = 'scoped memory for tpu_custom_call.1']
    #allocation4 [shape = 's32[2]{0}', space=sflag, size = 0x8, scoped, tag = 'scoped memory for tpu_custom_call.1']
    #allocation5 [shape = 'u8[65536]{0}', space=vmem, size = 0x10000, scoped, tag = 'output window, operand 0']
    %8 = vsyncpa [#allocation3], 0
    %s9 = scalar_lea.sflag [#allocation3], 1
    %10 = vsyncpa %s9, 0
    %11 = vsyncpa [#allocation4], 0
    %s12 = scalar_lea.sflag [#allocation4], 1
    %13 = vsyncpa %s12, 0
    loop: start=0, step=1, limit=4
    $region2: #{tpu_custom_call.1} parent=1 // loop_pre_header
      _
    $region3: #{tpu_custom_call.1} parent=1 // loop_header
      %s15 = sphi 0, %s19
      %p16 = scmp.ge.s32.totalorder %s15, 4
      %s22 = sphi 0, %s34
      %s23 = sphi 0, %s30
      %s24 = sphi 0, %s22
      %s25 = sphi 0, %s23
      %s26 = sphi 0, %s24
      %s27 = sphi 0, %s25
      %s39 = sphi 0, %s41
      %s42 = sphi 0, %s39
      %s43 = sphi 0, %s42
      %s59 = sphi 0, %s43
      %s63 = sphi 0, %s63
      %s65 = sphi 0, %s63
      %s66 = sphi 0, %s65
      %s80 = sphi 0, %s66
      %s84 = sphi 0, %s84
      %s86 = sphi 0, %s84
      %s87 = sphi 0, %s86
      %s101 = sphi 0, %s87
      %s109 = sphi 0, %s111
      %s112 = sphi 0, %s109
      %s113 = sphi 0, %s112
      %s129 = sphi 0, %s113
    $region4: #{tpu_custom_call.1} parent=1 // loop_header_branch
      %18 = sbr.rel (%p16) target = $region8
    $region5: #{tpu_custom_call.1} parent=1 // loop_body
      %s20 = ssub.s32 %s15, 1
      %s21 = ssub.s32 %s15, 2
      %s28 = sadd.s32 1, %s23
      %p29 = scmp.ge.s32.totalorder %s28, 1
      %s30 = scalar_select %p29, 0, %s28
      %s31 = sadd.s32 1, %s22
      %s32 = scalar_select %p29, %s31, %s22
      %p33 = scmp.ge.s32.totalorder %s32, 2
      %s34 = scalar_select %p33, 0, %s32
      %s35 = ssub.s32 %s22, %s34
      %s36 = ssub.s32 %s23, %s30
      %s37 = sor.u32 %s35, %s36
      %p38 = scmp.eq.s32.totalorder %s37, 0
      %s40 = sadd.s32 %s39, 1
      %s41 = scalar_select %p38, %s39, %s40
      %p44 = pneg %p38
      %p45 = scmp.eq.s32.totalorder %s15, 1
      %p46 = por %p44, %p45
      %p47 = scmp.ne.s32.totalorder %s39, %s42
      %p48 = scmp.eq.s32.totalorder %s15, 0
      %p49 = por %p47, %p48
      %p50 = scmp.ne.s32.totalorder %s39, %s42
      %p51 = scmp.eq.s32.totalorder %s20, 1
      %p52 = por %p50, %p51
      %p53 = scmp.ne.s32.totalorder %s42, %s43
      %p54 = scmp.eq.s32.totalorder %s20, 0
      %p55 = por %p53, %p54
      %p56 = scmp.ne.s32.totalorder %s42, %s43
      %p57 = scmp.eq.s32.totalorder %s21, 1
      %p58 = por %p56, %p57
      %p60 = scmp.ne.s32.totalorder %s43, %s59
      %p61 = scmp.eq.s32.totalorder %s21, 0
      %p62 = por %p60, %p61
      %s64 = sadd.s32 %s63, 1
      %p67 = scmp.eq.s32.totalorder %s15, 1
      %p68 = scmp.ne.s32.totalorder %s63, %s65
      %p69 = scmp.eq.s32.totalorder %s15, 0
      %p70 = por %p68, %p69
      %p71 = scmp.ne.s32.totalorder %s63, %s65
      %p72 = scmp.eq.s32.totalorder %s20, 1
      %p73 = por %p71, %p72
      %p74 = scmp.ne.s32.totalorder %s65, %s66
      %p75 = scmp.eq.s32.totalorder %s20, 0
      %p76 = por %p74, %p75
      %p77 = scmp.ne.s32.totalorder %s65, %s66
      %p78 = scmp.eq.s32.totalorder %s21, 1
      %p79 = por %p77, %p78
      %p81 = scmp.ne.s32.totalorder %s66, %s80
      %p82 = scmp.eq.s32.totalorder %s21, 0
      %p83 = por %p81, %p82
      %s85 = sadd.s32 %s84, 1
      %p88 = scmp.eq.s32.totalorder %s15, 1
      %p89 = scmp.ne.s32.totalorder %s84, %s86
      %p90 = scmp.eq.s32.totalorder %s15, 0
      %p91 = por %p89, %p90
      %p92 = scmp.ne.s32.totalorder %s84, %s86
      %p93 = scmp.eq.s32.totalorder %s20, 1
      %p94 = por %p92, %p93
      %p95 = scmp.ne.s32.totalorder %s86, %s87
      %p96 = scmp.eq.s32.totalorder %s20, 0
      %p97 = por %p95, %p96
      %p98 = scmp.ne.s32.totalorder %s86, %s87
      %p99 = scmp.eq.s32.totalorder %s21, 1
      %p100 = por %p98, %p99
      %p102 = scmp.ne.s32.totalorder %s87, %s101
      %p103 = scmp.eq.s32.totalorder %s21, 0
      %p104 = por %p102, %p103
      %s105 = ssub.s32 %s22, %s34
      %s106 = ssub.s32 %s23, %s30
      %s107 = sor.u32 %s105, %s106
      %p108 = scmp.eq.s32.totalorder %s107, 0
      %s110 = sadd.s32 %s109, 1
      %s111 = scalar_select %p108, %s109, %s110
      %p114 = pneg %p108
      %p115 = scmp.eq.s32.totalorder %s15, 1
      %p116 = por %p114, %p115
      %p117 = scmp.ne.s32.totalorder %s109, %s112
      %p118 = scmp.eq.s32.totalorder %s15, 0
      %p119 = por %p117, %p118
      %p120 = scmp.ne.s32.totalorder %s109, %s112
      %p121 = scmp.eq.s32.totalorder %s20, 1
      %p122 = por %p120, %p121
      %p123 = scmp.ne.s32.totalorder %s112, %s113
      %p124 = scmp.eq.s32.totalorder %s20, 0
      %p125 = por %p123, %p124
      %p126 = scmp.ne.s32.totalorder %s112, %s113
      %p127 = scmp.eq.s32.totalorder %s21, 1
      %p128 = por %p126, %p127
      %p130 = scmp.ne.s32.totalorder %s113, %s129
      %p131 = scmp.eq.s32.totalorder %s21, 0
      %p132 = por %p130, %p131
      %p133 = scmp.le.s32.totalorder 1, %s15
      %p134 = scmp.lt.s32.totalorder %s15, 3
      %p135 = pnand %p133, %p134
      %p136 = pneg %p135
      // Predicated region
      $region9: #{tpu_custom_call.1} parent=5 // pred_check
        _
      $region10: #{tpu_custom_call.1} parent=5 // pred_check_branch
        %138 = sbr.rel (%p135) target = $region12
      $region11: #{tpu_custom_call.1} parent=5 // pred_region
        %s139 = ssub.s32 %s15, 1
        // Predicated region
        $region13: #{tpu_custom_call.1} parent=11 // pred_check
          %p140 = pneg %p76
        $region14: #{tpu_custom_call.1} parent=11 // pred_check_branch
          %142 = sbr.rel (%p140) target = $region16
        $region15: #{tpu_custom_call.1} parent=11 // pred_region
          _
        $region16: #{tpu_custom_call.1} parent=11 // pred_fallthru
          _
        // Predicated region
        $region17: #{tpu_custom_call.1} parent=11 // pred_check
          %p143 = pneg %p97
        $region18: #{tpu_custom_call.1} parent=11 // pred_check_branch
          %145 = sbr.rel (%p143) target = $region20
        $region19: #{tpu_custom_call.1} parent=11 // pred_region
          _
        $region20: #{tpu_custom_call.1} parent=11 // pred_fallthru
          _
      $region12: #{tpu_custom_call.1} parent=5 // pred_fallthru
        _
      %p146 = scmp.lt.s32.totalorder %s15, 2
      // Predicated region
      $region21: #{tpu_custom_call.1} parent=5 // pred_check
        %p147 = pneg %p146
      $region22: #{tpu_custom_call.1} parent=5 // pred_check_branch
        %149 = sbr.rel (%p147) target = $region24
      $region23: #{tpu_custom_call.1} parent=5 // pred_region
        // Predicated region
        $region25: #{tpu_custom_call.1} parent=23 // pred_check
          %p150 = pneg %p49
        $region26: #{tpu_custom_call.1} parent=23 // pred_check_branch
          %152 = sbr.rel (%p150) target = $region28
        $region27: #{tpu_custom_call.1} parent=23 // pred_region
          %s153 = sand.u32 %s39, 1
          %s154 = scalar_lea.sflag [#allocation3], %s153
          %s155 = sand.u32 %s39, 1
          %s156 = smul.addr %s155, 128
          %s157 = scalar_lea.vmem [#allocation2], %s156
          %s158 = smul.u32 32, %s23
          %s160 = ssub.s32 2048, 2048
          %161 = vsyncadd %s154, %s160
          %s162 = smul.addr %s22, 32
          %s163 = sadd.s32 %s158, %s162
          %s164 = smul.addr %s163, 64
          %s165 = scalar_lea.hbm %s0, %s164
          %s167 = sshll.u32 %s157, 4
          %s168 = int_to_ptr.vmem [resolvable:$true] %s167
          %170 = dma.hbm_to_vmem [thread:$0]  %s165, 2048, %s168, %s154
        $region28: #{tpu_custom_call.1} parent=23 // pred_fallthru
          _
      $region24: #{tpu_custom_call.1} parent=5 // pred_fallthru
        _
      %p171 = scmp.le.s32.totalorder 1, %s15
      %p172 = scmp.lt.s32.totalorder %s15, 3
      %p173 = pnand %p171, %p172
      %p174 = pneg %p173
      // Predicated region
      $region29: #{tpu_custom_call.1} parent=5 // pred_check
        _
      $region30: #{tpu_custom_call.1} parent=5 // pred_check_branch
        %176 = sbr.rel (%p173) target = $region32
      $region31: #{tpu_custom_call.1} parent=5 // pred_region
        %s177 = ssub.s32 %s15, 1
        %s178 = sand.u32 %s42, 1
        %s179 = scalar_lea.sflag [#allocation3], %s178
        %s180 = sand.u32 %s42, 1
        %s181 = smul.addr %s180, 128
        %s182 = scalar_lea.vmem [#allocation2], %s181
        // Predicated region
        $region33: #{tpu_custom_call.1} parent=31 // pred_check
          %p183 = pneg %p55
        $region34: #{tpu_custom_call.1} parent=31 // pred_check_branch
          %185 = sbr.rel (%p183) target = $region36
        $region35: #{tpu_custom_call.1} parent=31 // pred_region
          %186 = dma.done %s179, 2048
        $region36: #{tpu_custom_call.1} parent=31 // pred_fallthru
          _
        %s187 = sand.u32 %s42, 1
        %s188 = scalar_lea.sflag [#allocation3], %s187
        %s189 = sand.u32 %s42, 1
        %s190 = smul.addr %s189, 128
        %s191 = scalar_lea.vmem [#allocation2], %s190
        %p192 = pneg %p55
        %p193 = pneg %p52
        %p194 = pneg %p76
        %p195 = pneg %p73
        %p196 = pneg %p97
        %p197 = pneg %p94
        %p198 = pneg %p125
        %p199 = pneg %p122
        %s200 = sand.u32 %s112, 1
        %s201 = scalar_lea.sflag [#allocation4], %s200
        %s202 = sand.u32 %s112, 1
        %s203 = smul.addr %s202, 64
        %s204 = scalar_lea.vmem [#allocation5], %s203
        %s205 = smul.u32 32, %s25
        %s206 = smul.u32 32, %s25
        %v207 = vld [vmem:[%s1] sm:$0x3]
        %v208 = vld [vmem:[%s182] sm:$0xff]
        %v209 = vld [vmem:[%s182 + $0x8] sm:$0xff]
        %v210 = vld [vmem:[%s182 + $0x10] sm:$0xff]
        %v211 = vld [vmem:[%s182 + $0x18] sm:$0xff]
        %v212 = vld [vmem:[%s182 + $0x20] sm:$0xff]
        %v213 = vld [vmem:[%s182 + $0x28] sm:$0xff]
        %v214 = vld [vmem:[%s182 + $0x30] sm:$0xff]
        %v215 = vld [vmem:[%s182 + $0x38] sm:$0xff]
        %v216 = vld [vmem:[%s182 + $0x40] sm:$0xff]
        %v217 = vld [vmem:[%s182 + $0x48] sm:$0xff]
        %v218 = vld [vmem:[%s182 + $0x50] sm:$0xff]
        %v219 = vld [vmem:[%s182 + $0x58] sm:$0xff]
        %v220 = vld [vmem:[%s182 + $0x60] sm:$0xff]
        %v221 = vld [vmem:[%s182 + $0x68] sm:$0xff]
        %v222 = vld [vmem:[%s182 + $0x70] sm:$0xff]
        %v223 = vld [vmem:[%s182 + $0x78] sm:$0xff]
        %v224 = vld [vmem:[%s2] sm:$0x3]
        %226 = vset.pattern.permute.xlu0 0
        %227 = vperm.xlu0 %226, %v224
        %v228 = vpop.permute.xlu0 %227
        %v246 = vcombine.high %v208, %v208
        %v247 = vcombine.high %v209, %v209
        %v248 = vcombine.high %v210, %v210
        %v249 = vcombine.high %v211, %v211
        %v250 = vcombine.high %v212, %v212
        %v251 = vcombine.high %v213, %v213
        %v252 = vcombine.high %v214, %v214
        %v253 = vcombine.high %v215, %v215
        %v254 = vcombine.high %v216, %v216
        %v255 = vcombine.high %v217, %v217
        %v256 = vcombine.high %v218, %v218
        %v257 = vcombine.high %v219, %v219
        %v258 = vcombine.high %v220, %v220
        %v259 = vcombine.high %v221, %v221
        %v260 = vcombine.high %v222, %v222
        %v261 = vcombine.high %v223, %v223
        %vm262 = vcmask 31744
        %v264 = vsel %vm262, %v207, 0
        %vm266 = vcmask 1043456
        %v267 = vsel %vm266, %v208, 0
        %v269 = vsel %vm266, %v246, 0
        %v271 = vsel %vm266, %v209, 0
        %v273 = vsel %vm266, %v247, 0
        %v275 = vsel %vm266, %v210, 0
        %v277 = vsel %vm266, %v248, 0
        %v279 = vsel %vm266, %v211, 0
        %v281 = vsel %vm266, %v249, 0
        %v283 = vsel %vm266, %v212, 0
        %v285 = vsel %vm266, %v250, 0
        %v287 = vsel %vm266, %v213, 0
        %v289 = vsel %vm266, %v251, 0
        %v291 = vsel %vm266, %v214, 0
        %v293 = vsel %vm266, %v252, 0
        %v295 = vsel %vm266, %v215, 0
        %v297 = vsel %vm266, %v253, 0
        %v299 = vsel %vm266, %v216, 0
        %v301 = vsel %vm266, %v254, 0
        %v303 = vsel %vm266, %v217, 0
        %v305 = vsel %vm266, %v255, 0
        %v307 = vsel %vm266, %v218, 0
        %v309 = vsel %vm266, %v256, 0
        %v311 = vsel %vm266, %v219, 0
        %v313 = vsel %vm266, %v257, 0
        %v315 = vsel %vm266, %v220, 0
        %v317 = vsel %vm266, %v258, 0
        %v319 = vsel %vm266, %v221, 0
        %v321 = vsel %vm266, %v259, 0
        %v323 = vsel %vm266, %v222, 0
        %v325 = vsel %vm266, %v260, 0
        %v327 = vsel %vm266, %v223, 0
        %v329 = vsel %vm266, %v261, 0
        %331 = vmatprep.subr.mxu0 %v269
        %332 = vmatpush1.msra.mxu0 %v267
        %333 = vmatprep.subr.mxu0 0.0
        %334 = vmatpush1.msra.mxu0 0.0
        %335 = vmatprep.subr.mxu0 0.0
        %336 = vmatpush1.msra.mxu0 0.0
        %337 = vmatprep.subr.mxu0 0.0
        %338 = vmatpush1.msra.mxu0 0.0
        %339 = vmatprep.subr.mxu0 0.0
        %340 = vmatpush1.msra.mxu0 0.0
        %341 = vmatprep.subr.mxu0 0.0
        %342 = vmatpush1.msra.mxu0 0.0
        %343 = vmatprep.subr.mxu0 0.0
        %344 = vmatpush1.msra.mxu0 0.0
        %345 = vmatprep.subr.mxu0 0.0
        %346 = vmatpush1.msra.mxu0 0.0
        %347 = vmatprep.subr.mxu0 0.0
        %348 = vmatpush1.msra.mxu0 0.0
        %349 = vmatprep.subr.mxu0 0.0
        %350 = vmatpush1.msra.mxu0 0.0
        %351 = vmatprep.subr.mxu0 0.0
        %352 = vmatpush1.msra.mxu0 0.0
        %353 = vmatprep.subr.mxu0 0.0
        %354 = vmatpush1.msra.mxu0 0.0
        %355 = vmatprep.subr.mxu0 0.0
        %356 = vmatpush1.msra.mxu0 0.0
        %357 = vmatprep.subr.mxu0 0.0
        %358 = vmatpush1.msra.mxu0 0.0
        %359 = vmatprep.subr.mxu0 0.0
        %360 = vmatpush1.msra.mxu0 0.0
        %361 = vmatprep.subr.mxu0 0.0
        %362 = vmatpush1.msra.mxu0 0.0
        %363 = vmatprep.subr.mxu0 0.0
        %364 = vmatpush1.msra.mxu0 0.0
        %365 = vmatprep.subr.mxu0 0.0
        %366 = vmatpush1.msra.mxu0 0.0
        %367 = vmatprep.subr.mxu0 0.0
        %368 = vmatpush1.msra.mxu0 0.0
        %369 = vmatprep.subr.mxu0 0.0
        %370 = vmatpush1.msra.mxu0 0.0
        %371 = vmatprep.subr.mxu0 0.0
        %372 = vmatpush1.msra.mxu0 0.0
        %373 = vmatprep.subr.mxu0 0.0
        %374 = vmatpush1.msra.mxu0 0.0
        %375 = vmatprep.subr.mxu0 0.0
        %376 = vmatpush1.msra.mxu0 0.0
        %377 = vmatprep.subr.mxu0 0.0
        %378 = vmatpush1.msra.mxu0 0.0
        %379 = vmatprep.subr.mxu0 0.0
        %380 = vmatpush1.msra.mxu0 0.0
        %381 = vmatprep.subr.mxu0 0.0
        %382 = vmatpush1.msra.mxu0 0.0
        %383 = vmatprep.subr.mxu0 0.0
        %384 = vmatpush1.msra.mxu0 0.0
        %385 = vmatprep.subr.mxu0 0.0
        %386 = vmatpush1.msra.mxu0 0.0
        %387 = vmatprep.subr.mxu0 0.0
        %388 = vmatpush1.msra.mxu0 0.0
        %389 = vmatprep.subr.mxu0 0.0
        %390 = vmatpush1.msra.mxu0 0.0
        %391 = vmatprep.subr.mxu0 0.0
        %392 = vmatpush1.msra.mxu0 0.0
        %393 = vmatprep.subr.mxu0 0.0
        %394 = vmatpush1.msra.mxu0 0.0
        %395 = vmatprep.mubr.f32.mxu0 0.0
        %396 = vmatmul.mubr.f32.gmra.mrb[0].mxu0 %v264
        %v397 = vpop.f32.mrb[0].mxu0
        %v398 = vadd.f32 %v228, %v397
        %v399 = vpop.f32.mrb[0].mxu0
        %v400 = vadd.f32 %v228, %v399
        %401 = vdwg.mxu0
        %402 = vmatprep.subr.mxu0 %v273
        %403 = vmatpush1.msra.mxu0 %v271
        %404 = vmatprep.subr.mxu0 0.0
        %405 = vmatpush1.msra.mxu0 0.0
        %406 = vmatprep.subr.mxu0 0.0
        %407 = vmatpush1.msra.mxu0 0.0
        %408 = vmatprep.subr.mxu0 0.0
        %409 = vmatpush1.msra.mxu0 0.0
        %410 = vmatprep.subr.mxu0 0.0
        %411 = vmatpush1.msra.mxu0 0.0
        %412 = vmatprep.subr.mxu0 0.0
        %413 = vmatpush1.msra.mxu0 0.0
        %414 = vmatprep.subr.mxu0 0.0
        %415 = vmatpush1.msra.mxu0 0.0
        %416 = vmatprep.subr.mxu0 0.0
        %417 = vmatpush1.msra.mxu0 0.0
        %418 = vmatprep.subr.mxu0 0.0
        %419 = vmatpush1.msra.mxu0 0.0
        %420 = vmatprep.subr.mxu0 0.0
        %421 = vmatpush1.msra.mxu0 0.0
        %422 = vmatprep.subr.mxu0 0.0
        %423 = vmatpush1.msra.mxu0 0.0
        %424 = vmatprep.subr.mxu0 0.0
        %425 = vmatpush1.msra.mxu0 0.0
        %426 = vmatprep.subr.mxu0 0.0
        %427 = vmatpush1.msra.mxu0 0.0
        %428 = vmatprep.subr.mxu0 0.0
        %429 = vmatpush1.msra.mxu0 0.0
        %430 = vmatprep.subr.mxu0 0.0
        %431 = vmatpush1.msra.mxu0 0.0
        %432 = vmatprep.subr.mxu0 0.0
        %433 = vmatpush1.msra.mxu0 0.0
        %434 = vmatprep.subr.mxu0 0.0
        %435 = vmatpush1.msra.mxu0 0.0
        %436 = vmatprep.subr.mxu0 0.0
        %437 = vmatpush1.msra.mxu0 0.0
        %438 = vmatprep.subr.mxu0 0.0
        %439 = vmatpush1.msra.mxu0 0.0
        %440 = vmatprep.subr.mxu0 0.0
        %441 = vmatpush1.msra.mxu0 0.0
        %442 = vmatprep.subr.mxu0 0.0
        %443 = vmatpush1.msra.mxu0 0.0
        %444 = vmatprep.subr.mxu0 0.0
        %445 = vmatpush1.msra.mxu0 0.0
        %446 = vmatprep.subr.mxu0 0.0
        %447 = vmatpush1.msra.mxu0 0.0
        %448 = vmatprep.subr.mxu0 0.0
        %449 = vmatpush1.msra.mxu0 0.0
        %450 = vmatprep.subr.mxu0 0.0
        %451 = vmatpush1.msra.mxu0 0.0
        %452 = vmatprep.subr.mxu0 0.0
        %453 = vmatpush1.msra.mxu0 0.0
        %454 = vmatprep.subr.mxu0 0.0
        %455 = vmatpush1.msra.mxu0 0.0
        %456 = vmatprep.subr.mxu0 0.0
        %457 = vmatpush1.msra.mxu0 0.0
        %458 = vmatprep.subr.mxu0 0.0
        %459 = vmatpush1.msra.mxu0 0.0
        %460 = vmatprep.subr.mxu0 0.0
        %461 = vmatpush1.msra.mxu0 0.0
        %462 = vmatprep.subr.mxu0 0.0
        %463 = vmatpush1.msra.mxu0 0.0
        %464 = vmatprep.subr.mxu0 0.0
        %465 = vmatpush1.msra.mxu0 0.0
        %466 = vmatprep.mubr.f32.mxu0 0.0
        %467 = vmatmul.mubr.f32.gmra.mrb[0].mxu0 %v264
        %v468 = vpop.f32.mrb[0].mxu0
        %v469 = vadd.f32 %v228, %v468
        %v470 = vpop.f32.mrb[0].mxu0
        %v471 = vadd.f32 %v228, %v470
        %472 = vdwg.mxu0
        %473 = vmatprep.subr.mxu0 %v277
        %474 = vmatpush1.msra.mxu0 %v275
        %475 = vmatprep.subr.mxu0 0.0
        %476 = vmatpush1.msra.mxu0 0.0
        %477 = vmatprep.subr.mxu0 0.0
        %478 = vmatpush1.msra.mxu0 0.0
        %479 = vmatprep.subr.mxu0 0.0
        %480 = vmatpush1.msra.mxu0 0.0
        %481 = vmatprep.subr.mxu0 0.0
        %482 = vmatpush1.msra.mxu0 0.0
        %483 = vmatprep.subr.mxu0 0.0
        %484 = vmatpush1.msra.mxu0 0.0
        %485 = vmatprep.subr.mxu0 0.0
        %486 = vmatpush1.msra.mxu0 0.0
        %487 = vmatprep.subr.mxu0 0.0
        %488 = vmatpush1.msra.mxu0 0.0
        %489 = vmatprep.subr.mxu0 0.0
        %490 = vmatpush1.msra.mxu0 0.0
        %491 = vmatprep.subr.mxu0 0.0
        %492 = vmatpush1.msra.mxu0 0.0
        %493 = vmatprep.subr.mxu0 0.0
        %494 = vmatpush1.msra.mxu0 0.0
        %495 = vmatprep.subr.mxu0 0.0
        %496 = vmatpush1.msra.mxu0 0.0
        %497 = vmatprep.subr.mxu0 0.0
        %498 = vmatpush1.msra.mxu0 0.0
        %499 = vmatprep.subr.mxu0 0.0
        %500 = vmatpush1.msra.mxu0 0.0
        %501 = vmatprep.subr.mxu0 0.0
        %502 = vmatpush1.msra.mxu0 0.0
        %503 = vmatprep.subr.mxu0 0.0
        %504 = vmatpush1.msra.mxu0 0.0
        %505 = vmatprep.subr.mxu0 0.0
        %506 = vmatpush1.msra.mxu0 0.0
        %507 = vmatprep.subr.mxu0 0.0
        %508 = vmatpush1.msra.mxu0 0.0
        %509 = vmatprep.subr.mxu0 0.0
        %510 = vmatpush1.msra.mxu0 0.0
        %511 = vmatprep.subr.mxu0 0.0
        %512 = vmatpush1.msra.mxu0 0.0
        %513 = vmatprep.subr.mxu0 0.0
        %514 = vmatpush1.msra.mxu0 0.0
        %515 = vmatprep.subr.mxu0 0.0
        %516 = vmatpush1.msra.mxu0 0.0
        %517 = vmatprep.subr.mxu0 0.0
        %518 = vmatpush1.msra.mxu0 0.0
        %519 = vmatprep.subr.mxu0 0.0
        %520 = vmatpush1.msra.mxu0 0.0
        %521 = vmatprep.subr.mxu0 0.0
        %522 = vmatpush1.msra.mxu0 0.0
        %523 = vmatprep.subr.mxu0 0.0
        %524 = vmatpush1.msra.mxu0 0.0
        %525 = vmatprep.subr.mxu0 0.0
        %526 = vmatpush1.msra.mxu0 0.0
        %527 = vmatprep.subr.mxu0 0.0
        %528 = vmatpush1.msra.mxu0 0.0
        %529 = vmatprep.subr.mxu0 0.0
        %530 = vmatpush1.msra.mxu0 0.0
        %531 = vmatprep.subr.mxu0 0.0
        %532 = vmatpush1.msra.mxu0 0.0
        %533 = vmatprep.subr.mxu0 0.0
        %534 = vmatpush1.msra.mxu0 0.0
        %535 = vmatprep.subr.mxu0 0.0
        %536 = vmatpush1.msra.mxu0 0.0
        %537 = vmatprep.mubr.f32.mxu0 0.0
        %538 = vmatmul.mubr.f32.gmra.mrb[0].mxu0 %v264
        %v539 = vpop.f32.mrb[0].mxu0
        %v540 = vadd.f32 %v228, %v539
        %v541 = vpop.f32.mrb[0].mxu0
        %v542 = vadd.f32 %v228, %v541
        %543 = vdwg.mxu0
        %544 = vmatprep.subr.mxu0 %v281
        %545 = vmatpush1.msra.mxu0 %v279
        %546 = vmatprep.subr.mxu0 0.0
        %547 = vmatpush1.msra.mxu0 0.0
        %548 = vmatprep.subr.mxu0 0.0
        %549 = vmatpush1.msra.mxu0 0.0
        %550 = vmatprep.subr.mxu0 0.0
        %551 = vmatpush1.msra.mxu0 0.0
        %552 = vmatprep.subr.mxu0 0.0
        %553 = vmatpush1.msra.mxu0 0.0
        %554 = vmatprep.subr.mxu0 0.0
        %555 = vmatpush1.msra.mxu0 0.0
        %556 = vmatprep.subr.mxu0 0.0
        %557 = vmatpush1.msra.mxu0 0.0
        %558 = vmatprep.subr.mxu0 0.0
        %559 = vmatpush1.msra.mxu0 0.0
        %560 = vmatprep.subr.mxu0 0.0
        %561 = vmatpush1.msra.mxu0 0.0
        %562 = vmatprep.subr.mxu0 0.0
        %563 = vmatpush1.msra.mxu0 0.0
        %564 = vmatprep.subr.mxu0 0.0
        %565 = vmatpush1.msra.mxu0 0.0
        %566 = vmatprep.subr.mxu0 0.0
        %567 = vmatpush1.msra.mxu0 0.0
        %568 = vmatprep.subr.mxu0 0.0
        %569 = vmatpush1.msra.mxu0 0.0
        %570 = vmatprep.subr.mxu0 0.0
        %571 = vmatpush1.msra.mxu0 0.0
        %572 = vmatprep.subr.mxu0 0.0
        %573 = vmatpush1.msra.mxu0 0.0
        %574 = vmatprep.subr.mxu0 0.0
        %575 = vmatpush1.msra.mxu0 0.0
        %576 = vmatprep.subr.mxu0 0.0
        %577 = vmatpush1.msra.mxu0 0.0
        %578 = vmatprep.subr.mxu0 0.0
        %579 = vmatpush1.msra.mxu0 0.0
        %580 = vmatprep.subr.mxu0 0.0
        %581 = vmatpush1.msra.mxu0 0.0
        %582 = vmatprep.subr.mxu0 0.0
        %583 = vmatpush1.msra.mxu0 0.0
        %584 = vmatprep.subr.mxu0 0.0
        %585 = vmatpush1.msra.mxu0 0.0
        %586 = vmatprep.subr.mxu0 0.0
        %587 = vmatpush1.msra.mxu0 0.0
        %588 = vmatprep.subr.mxu0 0.0
        %589 = vmatpush1.msra.mxu0 0.0
        %590 = vmatprep.subr.mxu0 0.0
        %591 = vmatpush1.msra.mxu0 0.0
        %592 = vmatprep.subr.mxu0 0.0
        %593 = vmatpush1.msra.mxu0 0.0
        %594 = vmatprep.subr.mxu0 0.0
        %595 = vmatpush1.msra.mxu0 0.0
        %596 = vmatprep.subr.mxu0 0.0
        %597 = vmatpush1.msra.mxu0 0.0
        %598 = vmatprep.subr.mxu0 0.0
        %599 = vmatpush1.msra.mxu0 0.0
        %600 = vmatprep.subr.mxu0 0.0
        %601 = vmatpush1.msra.mxu0 0.0
        %602 = vmatprep.subr.mxu0 0.0
        %603 = vmatpush1.msra.mxu0 0.0
        %604 = vmatprep.subr.mxu0 0.0
        %605 = vmatpush1.msra.mxu0 0.0
        %606 = vmatprep.subr.mxu0 0.0
        %607 = vmatpush1.msra.mxu0 0.0
        %608 = vmatprep.mubr.f32.mxu0 0.0
        %609 = vmatmul.mubr.f32.gmra.mrb[0].mxu0 %v264
        %v610 = vpop.f32.mrb[0].mxu0
        %v611 = vadd.f32 %v228, %v610
        %v612 = vpop.f32.mrb[0].mxu0
        %v613 = vadd.f32 %v228, %v612
        %614 = vdwg.mxu0
        %615 = vmatprep.subr.mxu0 %v285
        %616 = vmatpush1.msra.mxu0 %v283
        %617 = vmatprep.subr.mxu0 0.0
        %618 = vmatpush1.msra.mxu0 0.0
        %619 = vmatprep.subr.mxu0 0.0
        %620 = vmatpush1.msra.mxu0 0.0
        %621 = vmatprep.subr.mxu0 0.0
        %622 = vmatpush1.msra.mxu0 0.0
        %623 = vmatprep.subr.mxu0 0.0
        %624 = vmatpush1.msra.mxu0 0.0
        %625 = vmatprep.subr.mxu0 0.0
        %626 = vmatpush1.msra.mxu0 0.0
        %627 = vmatprep.subr.mxu0 0.0
        %628 = vmatpush1.msra.mxu0 0.0
        %629 = vmatprep.subr.mxu0 0.0
        %630 = vmatpush1.msra.mxu0 0.0
        %631 = vmatprep.subr.mxu0 0.0
        %632 = vmatpush1.msra.mxu0 0.0
        %633 = vmatprep.subr.mxu0 0.0
        %634 = vmatpush1.msra.mxu0 0.0
        %635 = vmatprep.subr.mxu0 0.0
        %636 = vmatpush1.msra.mxu0 0.0
        %637 = vmatprep.subr.mxu0 0.0
        %638 = vmatpush1.msra.mxu0 0.0
        %639 = vmatprep.subr.mxu0 0.0
        %640 = vmatpush1.msra.mxu0 0.0
        %641 = vmatprep.subr.mxu0 0.0
        %642 = vmatpush1.msra.mxu0 0.0
        %643 = vmatprep.subr.mxu0 0.0
        %644 = vmatpush1.msra.mxu0 0.0
        %645 = vmatprep.subr.mxu0 0.0
        %646 = vmatpush1.msra.mxu0 0.0
        %647 = vmatprep.subr.mxu0 0.0
        %648 = vmatpush1.msra.mxu0 0.0
        %649 = vmatprep.subr.mxu0 0.0
        %650 = vmatpush1.msra.mxu0 0.0
        %651 = vmatprep.subr.mxu0 0.0
        %652 = vmatpush1.msra.mxu0 0.0
        %653 = vmatprep.subr.mxu0 0.0
        %654 = vmatpush1.msra.mxu0 0.0
        %655 = vmatprep.subr.mxu0 0.0
        %656 = vmatpush1.msra.mxu0 0.0
        %657 = vmatprep.subr.mxu0 0.0
        %658 = vmatpush1.msra.mxu0 0.0
        %659 = vmatprep.subr.mxu0 0.0
        %660 = vmatpush1.msra.mxu0 0.0
        %661 = vmatprep.subr.mxu0 0.0
        %662 = vmatpush1.msra.mxu0 0.0
        %663 = vmatprep.subr.mxu0 0.0
        %664 = vmatpush1.msra.mxu0 0.0
        %665 = vmatprep.subr.mxu0 0.0
        %666 = vmatpush1.msra.mxu0 0.0
        %667 = vmatprep.subr.mxu0 0.0
        %668 = vmatpush1.msra.mxu0 0.0
        %669 = vmatprep.subr.mxu0 0.0
        %670 = vmatpush1.msra.mxu0 0.0
        %671 = vmatprep.subr.mxu0 0.0
        %672 = vmatpush1.msra.mxu0 0.0
        %673 = vmatprep.subr.mxu0 0.0
        %674 = vmatpush1.msra.mxu0 0.0
        %675 = vmatprep.subr.mxu0 0.0
        %676 = vmatpush1.msra.mxu0 0.0
        %677 = vmatprep.subr.mxu0 0.0
        %678 = vmatpush1.msra.mxu0 0.0
        %679 = vmatprep.mubr.f32.mxu0 0.0
        %680 = vmatmul.mubr.f32.gmra.mrb[0].mxu0 %v264
        %v681 = vpop.f32.mrb[0].mxu0
        %v682 = vadd.f32 %v228, %v681
        %v683 = vpop.f32.mrb[0].mxu0
        %v684 = vadd.f32 %v228, %v683
        %685 = vdwg.mxu0
        %686 = vmatprep.subr.mxu0 %v289
        %687 = vmatpush1.msra.mxu0 %v287
        %688 = vmatprep.subr.mxu0 0.0
        %689 = vmatpush1.msra.mxu0 0.0
        %690 = vmatprep.subr.mxu0 0.0
        %691 = vmatpush1.msra.mxu0 0.0
        %692 = vmatprep.subr.mxu0 0.0
        %693 = vmatpush1.msra.mxu0 0.0
        %694 = vmatprep.subr.mxu0 0.0
        %695 = vmatpush1.msra.mxu0 0.0
        %696 = vmatprep.subr.mxu0 0.0
        %697 = vmatpush1.msra.mxu0 0.0
        %698 = vmatprep.subr.mxu0 0.0
        %699 = vmatpush1.msra.mxu0 0.0
        %700 = vmatprep.subr.mxu0 0.0
        %701 = vmatpush1.msra.mxu0 0.0
        %702 = vmatprep.subr.mxu0 0.0
        %703 = vmatpush1.msra.mxu0 0.0
        %704 = vmatprep.subr.mxu0 0.0
        %705 = vmatpush1.msra.mxu0 0.0
        %706 = vmatprep.subr.mxu0 0.0
        %707 = vmatpush1.msra.mxu0 0.0
        %708 = vmatprep.subr.mxu0 0.0
        %709 = vmatpush1.msra.mxu0 0.0
        %710 = vmatprep.subr.mxu0 0.0
        %711 = vmatpush1.msra.mxu0 0.0
        %712 = vmatprep.subr.mxu0 0.0
        %713 = vmatpush1.msra.mxu0 0.0
        %714 = vmatprep.subr.mxu0 0.0
        %715 = vmatpush1.msra.mxu0 0.0
        %716 = vmatprep.subr.mxu0 0.0
        %717 = vmatpush1.msra.mxu0 0.0
        %718 = vmatprep.subr.mxu0 0.0
        %719 = vmatpush1.msra.mxu0 0.0
        %720 = vmatprep.subr.mxu0 0.0
        %721 = vmatpush1.msra.mxu0 0.0
        %722 = vmatprep.subr.mxu0 0.0
        %723 = vmatpush1.msra.mxu0 0.0
        %724 = vmatprep.subr.mxu0 0.0
        %725 = vmatpush1.msra.mxu0 0.0
        %726 = vmatprep.subr.mxu0 0.0
        %727 = vmatpush1.msra.mxu0 0.0
        %728 = vmatprep.subr.mxu0 0.0
        %729 = vmatpush1.msra.mxu0 0.0
        %730 = vmatprep.subr.mxu0 0.0
        %731 = vmatpush1.msra.mxu0 0.0
        %732 = vmatprep.subr.mxu0 0.0
        %733 = vmatpush1.msra.mxu0 0.0
        %734 = vmatprep.subr.mxu0 0.0
        %735 = vmatpush1.msra.mxu0 0.0
        %736 = vmatprep.subr.mxu0 0.0
        %737 = vmatpush1.msra.mxu0 0.0
        %738 = vmatprep.subr.mxu0 0.0
        %739 = vmatpush1.msra.mxu0 0.0
        %740 = vmatprep.subr.mxu0 0.0
        %741 = vmatpush1.msra.mxu0 0.0
        %742 = vmatprep.subr.mxu0 0.0
        %743 = vmatpush1.msra.mxu0 0.0
        %744 = vmatprep.subr.mxu0 0.0
        %745 = vmatpush1.msra.mxu0 0.0
        %746 = vmatprep.subr.mxu0 0.0
        %747 = vmatpush1.msra.mxu0 0.0
        %748 = vmatprep.subr.mxu0 0.0
        %749 = vmatpush1.msra.mxu0 0.0
        %750 = vmatprep.mubr.f32.mxu0 0.0
        %751 = vmatmul.mubr.f32.gmra.mrb[0].mxu0 %v264
        %v752 = vpop.f32.mrb[0].mxu0
        %v753 = vadd.f32 %v228, %v752
        %v754 = vpop.f32.mrb[0].mxu0
        %v755 = vadd.f32 %v228, %v754
        %756 = vdwg.mxu0
        %757 = vmatprep.subr.mxu0 %v293
        %758 = vmatpush1.msra.mxu0 %v291
        %759 = vmatprep.subr.mxu0 0.0
        %760 = vmatpush1.msra.mxu0 0.0
        %761 = vmatprep.subr.mxu0 0.0
        %762 = vmatpush1.msra.mxu0 0.0
        %763 = vmatprep.subr.mxu0 0.0
        %764 = vmatpush1.msra.mxu0 0.0
        %765 = vmatprep.subr.mxu0 0.0
        %766 = vmatpush1.msra.mxu0 0.0
        %767 = vmatprep.subr.mxu0 0.0
        %768 = vmatpush1.msra.mxu0 0.0
        %769 = vmatprep.subr.mxu0 0.0
        %770 = vmatpush1.msra.mxu0 0.0
        %771 = vmatprep.subr.mxu0 0.0
        %772 = vmatpush1.msra.mxu0 0.0
        %773 = vmatprep.subr.mxu0 0.0
        %774 = vmatpush1.msra.mxu0 0.0
        %775 = vmatprep.subr.mxu0 0.0
        %776 = vmatpush1.msra.mxu0 0.0
        %777 = vmatprep.subr.mxu0 0.0
        %778 = vmatpush1.msra.mxu0 0.0
        %779 = vmatprep.subr.mxu0 0.0
        %780 = vmatpush1.msra.mxu0 0.0
        %781 = vmatprep.subr.mxu0 0.0
        %782 = vmatpush1.msra.mxu0 0.0
        %783 = vmatprep.subr.mxu0 0.0
        %784 = vmatpush1.msra.mxu0 0.0
        %785 = vmatprep.subr.mxu0 0.0
        %786 = vmatpush1.msra.mxu0 0.0
        %787 = vmatprep.subr.mxu0 0.0
        %788 = vmatpush1.msra.mxu0 0.0
        %789 = vmatprep.subr.mxu0 0.0
        %790 = vmatpush1.msra.mxu0 0.0
        %791 = vmatprep.subr.mxu0 0.0
        %792 = vmatpush1.msra.mxu0 0.0
        %793 = vmatprep.subr.mxu0 0.0
        %794 = vmatpush1.msra.mxu0 0.0
        %795 = vmatprep.subr.mxu0 0.0
        %796 = vmatpush1.msra.mxu0 0.0
        %797 = vmatprep.subr.mxu0 0.0
        %798 = vmatpush1.msra.mxu0 0.0
        %799 = vmatprep.subr.mxu0 0.0
        %800 = vmatpush1.msra.mxu0 0.0
        %801 = vmatprep.subr.mxu0 0.0
        %802 = vmatpush1.msra.mxu0 0.0
        %803 = vmatprep.subr.mxu0 0.0
        %804 = vmatpush1.msra.mxu0 0.0
        %805 = vmatprep.subr.mxu0 0.0
        %806 = vmatpush1.msra.mxu0 0.0
        %807 = vmatprep.subr.mxu0 0.0
        %808 = vmatpush1.msra.mxu0 0.0
        %809 = vmatprep.subr.mxu0 0.0
        %810 = vmatpush1.msra.mxu0 0.0
        %811 = vmatprep.subr.mxu0 0.0
        %812 = vmatpush1.msra.mxu0 0.0
        %813 = vmatprep.subr.mxu0 0.0
        %814 = vmatpush1.msra.mxu0 0.0
        %815 = vmatprep.subr.mxu0 0.0
        %816 = vmatpush1.msra.mxu0 0.0
        %817 = vmatprep.subr.mxu0 0.0
        %818 = vmatpush1.msra.mxu0 0.0
        %819 = vmatprep.subr.mxu0 0.0
        %820 = vmatpush1.msra.mxu0 0.0
        %821 = vmatprep.mubr.f32.mxu0 0.0
        %822 = vmatmul.mubr.f32.gmra.mrb[0].mxu0 %v264
        %v823 = vpop.f32.mrb[0].mxu0
        %v824 = vadd.f32 %v228, %v823
        %v825 = vpop.f32.mrb[0].mxu0
        %v826 = vadd.f32 %v228, %v825
        %827 = vdwg.mxu0
        %828 = vmatprep.subr.mxu0 %v297
        %829 = vmatpush1.msra.mxu0 %v295
        %830 = vmatprep.subr.mxu0 0.0
        %831 = vmatpush1.msra.mxu0 0.0
        %832 = vmatprep.subr.mxu0 0.0
        %833 = vmatpush1.msra.mxu0 0.0
        %834 = vmatprep.subr.mxu0 0.0
        %835 = vmatpush1.msra.mxu0 0.0
        %836 = vmatprep.subr.mxu0 0.0
        %837 = vmatpush1.msra.mxu0 0.0
        %838 = vmatprep.subr.mxu0 0.0
        %839 = vmatpush1.msra.mxu0 0.0
        %840 = vmatprep.subr.mxu0 0.0
        %841 = vmatpush1.msra.mxu0 0.0
        %842 = vmatprep.subr.mxu0 0.0
        %843 = vmatpush1.msra.mxu0 0.0
        %844 = vmatprep.subr.mxu0 0.0
        %845 = vmatpush1.msra.mxu0 0.0
        %846 = vmatprep.subr.mxu0 0.0
        %847 = vmatpush1.msra.mxu0 0.0
        %848 = vmatprep.subr.mxu0 0.0
        %849 = vmatpush1.msra.mxu0 0.0
        %850 = vmatprep.subr.mxu0 0.0
        %851 = vmatpush1.msra.mxu0 0.0
        %852 = vmatprep.subr.mxu0 0.0
        %853 = vmatpush1.msra.mxu0 0.0
        %854 = vmatprep.subr.mxu0 0.0
        %855 = vmatpush1.msra.mxu0 0.0
        %856 = vmatprep.subr.mxu0 0.0
        %857 = vmatpush1.msra.mxu0 0.0
        %858 = vmatprep.subr.mxu0 0.0
        %859 = vmatpush1.msra.mxu0 0.0
        %860 = vmatprep.subr.mxu0 0.0
        %861 = vmatpush1.msra.mxu0 0.0
        %862 = vmatprep.subr.mxu0 0.0
        %863 = vmatpush1.msra.mxu0 0.0
        %864 = vmatprep.subr.mxu0 0.0
        %865 = vmatpush1.msra.mxu0 0.0
        %866 = vmatprep.subr.mxu0 0.0
        %867 = vmatpush1.msra.mxu0 0.0
        %868 = vmatprep.subr.mxu0 0.0
        %869 = vmatpush1.msra.mxu0 0.0
        %870 = vmatprep.subr.mxu0 0.0
        %871 = vmatpush1.msra.mxu0 0.0
        %872 = vmatprep.subr.mxu0 0.0
        %873 = vmatpush1.msra.mxu0 0.0
        %874 = vmatprep.subr.mxu0 0.0
        %875 = vmatpush1.msra.mxu0 0.0
        %876 = vmatprep.subr.mxu0 0.0
        %877 = vmatpush1.msra.mxu0 0.0
        %878 = vmatprep.subr.mxu0 0.0
        %879 = vmatpush1.msra.mxu0 0.0
        %880 = vmatprep.subr.mxu0 0.0
        %881 = vmatpush1.msra.mxu0 0.0
        %882 = vmatprep.subr.mxu0 0.0
        %883 = vmatpush1.msra.mxu0 0.0
        %884 = vmatprep.subr.mxu0 0.0
        %885 = vmatpush1.msra.mxu0 0.0
        %886 = vmatprep.subr.mxu0 0.0
        %887 = vmatpush1.msra.mxu0 0.0
        %888 = vmatprep.subr.mxu0 0.0
        %889 = vmatpush1.msra.mxu0 0.0
        %890 = vmatprep.subr.mxu0 0.0
        %891 = vmatpush1.msra.mxu0 0.0
        %892 = vmatprep.mubr.f32.mxu0 0.0
        %893 = vmatmul.mubr.f32.gmra.mrb[0].mxu0 %v264
        %v894 = vpop.f32.mrb[0].mxu0
        %v895 = vadd.f32 %v228, %v894
        %v896 = vpop.f32.mrb[0].mxu0
        %v897 = vadd.f32 %v228, %v896
        %898 = vdwg.mxu0
        %899 = vmatprep.subr.mxu0 %v301
        %900 = vmatpush1.msra.mxu0 %v299
        %901 = vmatprep.subr.mxu0 0.0
        %902 = vmatpush1.msra.mxu0 0.0
        %903 = vmatprep.subr.mxu0 0.0
        %904 = vmatpush1.msra.mxu0 0.0
        %905 = vmatprep.subr.mxu0 0.0
        %906 = vmatpush1.msra.mxu0 0.0
        %907 = vmatprep.subr.mxu0 0.0
        %908 = vmatpush1.msra.mxu0 0.0
        %909 = vmatprep.subr.mxu0 0.0
        %910 = vmatpush1.msra.mxu0 0.0
        %911 = vmatprep.subr.mxu0 0.0
        %912 = vmatpush1.msra.mxu0 0.0
        %913 = vmatprep.subr.mxu0 0.0
        %914 = vmatpush1.msra.mxu0 0.0
        %915 = vmatprep.subr.mxu0 0.0
        %916 = vmatpush1.msra.mxu0 0.0
        %917 = vmatprep.subr.mxu0 0.0
        %918 = vmatpush1.msra.mxu0 0.0
        %919 = vmatprep.subr.mxu0 0.0
        %920 = vmatpush1.msra.mxu0 0.0
        %921 = vmatprep.subr.mxu0 0.0
        %922 = vmatpush1.msra.mxu0 0.0
        %923 = vmatprep.subr.mxu0 0.0
        %924 = vmatpush1.msra.mxu0 0.0
        %925 = vmatprep.subr.mxu0 0.0
        %926 = vmatpush1.msra.mxu0 0.0
        %927 = vmatprep.subr.mxu0 0.0
        %928 = vmatpush1.msra.mxu0 0.0
        %929 = vmatprep.subr.mxu0 0.0
        %930 = vmatpush1.msra.mxu0 0.0
        %931 = vmatprep.subr.mxu0 0.0
        %932 = vmatpush1.msra.mxu0 0.0
        %933 = vmatprep.subr.mxu0 0.0
        %934 = vmatpush1.msra.mxu0 0.0
        %935 = vmatprep.subr.mxu0 0.0
        %936 = vmatpush1.msra.mxu0 0.0
        %937 = vmatprep.subr.mxu0 0.0
        %938 = vmatpush1.msra.mxu0 0.0
        %939 = vmatprep.subr.mxu0 0.0
        %940 = vmatpush1.msra.mxu0 0.0
        %941 = vmatprep.subr.mxu0 0.0
        %942 = vmatpush1.msra.mxu0 0.0
        %943 = vmatprep.subr.mxu0 0.0
        %944 = vmatpush1.msra.mxu0 0.0
        %945 = vmatprep.subr.mxu0 0.0
        %946 = vmatpush1.msra.mxu0 0.0
        %947 = vmatprep.subr.mxu0 0.0
        %948 = vmatpush1.msra.mxu0 0.0
        %949 = vmatprep.subr.mxu0 0.0
        %950 = vmatpush1.msra.mxu0 0.0
        %951 = vmatprep.subr.mxu0 0.0
        %952 = vmatpush1.msra.mxu0 0.0
        %953 = vmatprep.subr.mxu0 0.0
        %954 = vmatpush1.msra.mxu0 0.0
        %955 = vmatprep.subr.mxu0 0.0
        %956 = vmatpush1.msra.mxu0 0.0
        %957 = vmatprep.subr.mxu0 0.0
        %958 = vmatpush1.msra.mxu0 0.0
        %959 = vmatprep.subr.mxu0 0.0
        %960 = vmatpush1.msra.mxu0 0.0
        %961 = vmatprep.subr.mxu0 0.0
        %962 = vmatpush1.msra.mxu0 0.0
        %963 = vmatprep.mubr.f32.mxu0 0.0
        %964 = vmatmul.mubr.f32.gmra.mrb[0].mxu0 %v264
        %v965 = vpop.f32.mrb[0].mxu0
        %v966 = vadd.f32 %v228, %v965
        %v967 = vpop.f32.mrb[0].mxu0
        %v968 = vadd.f32 %v228, %v967
        %969 = vdwg.mxu0
        %970 = vmatprep.subr.mxu0 %v305
        %971 = vmatpush1.msra.mxu0 %v303
        %972 = vmatprep.subr.mxu0 0.0
        %973 = vmatpush1.msra.mxu0 0.0
        %974 = vmatprep.subr.mxu0 0.0
        %975 = vmatpush1.msra.mxu0 0.0
        %976 = vmatprep.subr.mxu0 0.0
        %977 = vmatpush1.msra.mxu0 0.0
        %978 = vmatprep.subr.mxu0 0.0
        %979 = vmatpush1.msra.mxu0 0.0
        %980 = vmatprep.subr.mxu0 0.0
        %981 = vmatpush1.msra.mxu0 0.0
        %982 = vmatprep.subr.mxu0 0.0
        %983 = vmatpush1.msra.mxu0 0.0
        %984 = vmatprep.subr.mxu0 0.0
        %985 = vmatpush1.msra.mxu0 0.0
        %986 = vmatprep.subr.mxu0 0.0
        %987 = vmatpush1.msra.mxu0 0.0
        %988 = vmatprep.subr.mxu0 0.0
        %989 = vmatpush1.msra.mxu0 0.0
        %990 = vmatprep.subr.mxu0 0.0
        %991 = vmatpush1.msra.mxu0 0.0
        %992 = vmatprep.subr.mxu0 0.0
        %993 = vmatpush1.msra.mxu0 0.0
        %994 = vmatprep.subr.mxu0 0.0
        %995 = vmatpush1.msra.mxu0 0.0
        %996 = vmatprep.subr.mxu0 0.0
        %997 = vmatpush1.msra.mxu0 0.0
        %998 = vmatprep.subr.mxu0 0.0
        %999 = vmatpush1.msra.mxu0 0.0
        %1000 = vmatprep.subr.mxu0 0.0
        %1001 = vmatpush1.msra.mxu0 0.0
        %1002 = vmatprep.subr.mxu0 0.0
        %1003 = vmatpush1.msra.mxu0 0.0
        %1004 = vmatprep.subr.mxu0 0.0
        %1005 = vmatpush1.msra.mxu0 0.0
        %1006 = vmatprep.subr.mxu0 0.0
        %1007 = vmatpush1.msra.mxu0 0.0
        %1008 = vmatprep.subr.mxu0 0.0
        %1009 = vmatpush1.msra.mxu0 0.0
        %1010 = vmatprep.subr.mxu0 0.0
        %1011 = vmatpush1.msra.mxu0 0.0
        %1012 = vmatprep.subr.mxu0 0.0
        %1013 = vmatpush1.msra.mxu0 0.0
        %1014 = vmatprep.subr.mxu0 0.0
        %1015 = vmatpush1.msra.mxu0 0.0
        %1016 = vmatprep.subr.mxu0 0.0
        %1017 = vmatpush1.msra.mxu0 0.0
        %1018 = vmatprep.subr.mxu0 0.0
        %1019 = vmatpush1.msra.mxu0 0.0
        %1020 = vmatprep.subr.mxu0 0.0
        %1021 = vmatpush1.msra.mxu0 0.0
        %1022 = vmatprep.subr.mxu0 0.0
        %1023 = vmatpush1.msra.mxu0 0.0
        %1024 = vmatprep.subr.mxu0 0.0
        %1025 = vmatpush1.msra.mxu0 0.0
        %1026 = vmatprep.subr.mxu0 0.0
        %1027 = vmatpush1.msra.mxu0 0.0
        %1028 = vmatprep.subr.mxu0 0.0
        %1029 = vmatpush1.msra.mxu0 0.0
        %1030 = vmatprep.subr.mxu0 0.0
        %1031 = vmatpush1.msra.mxu0 0.0
        %1032 = vmatprep.subr.mxu0 0.0
        %1033 = vmatpush1.msra.mxu0 0.0
        %1034 = vmatprep.mubr.f32.mxu0 0.0
        %1035 = vmatmul.mubr.f32.gmra.mrb[0].mxu0 %v264
        %v1036 = vpop.f32.mrb[0].mxu0
        %v1037 = vadd.f32 %v228, %v1036
        %v1038 = vpop.f32.mrb[0].mxu0
        %v1039 = vadd.f32 %v228, %v1038
        %1040 = vdwg.mxu0
        %1041 = vmatprep.subr.mxu0 %v309
        %1042 = vmatpush1.msra.mxu0 %v307
        %1043 = vmatprep.subr.mxu0 0.0
        %1044 = vmatpush1.msra.mxu0 0.0
        %1045 = vmatprep.subr.mxu0 0.0
        %1046 = vmatpush1.msra.mxu0 0.0
        %1047 = vmatprep.subr.mxu0 0.0
        %1048 = vmatpush1.msra.mxu0 0.0
        %1049 = vmatprep.subr.mxu0 0.0
        %1050 = vmatpush1.msra.mxu0 0.0
        %1051 = vmatprep.subr.mxu0 0.0
        %1052 = vmatpush1.msra.mxu0 0.0
        %1053 = vmatprep.subr.mxu0 0.0
        %1054 = vmatpush1.msra.mxu0 0.0
        %1055 = vmatprep.subr.mxu0 0.0
        %1056 = vmatpush1.msra.mxu0 0.0
        %1057 = vmatprep.subr.mxu0 0.0
        %1058 = vmatpush1.msra.mxu0 0.0
        %1059 = vmatprep.subr.mxu0 0.0
        %1060 = vmatpush1.msra.mxu0 0.0
        %1061 = vmatprep.subr.mxu0 0.0
        %1062 = vmatpush1.msra.mxu0 0.0
        %1063 = vmatprep.subr.mxu0 0.0
        %1064 = vmatpush1.msra.mxu0 0.0
        %1065 = vmatprep.subr.mxu0 0.0
        %1066 = vmatpush1.msra.mxu0 0.0
        %1067 = vmatprep.subr.mxu0 0.0
        %1068 = vmatpush1.msra.mxu0 0.0
        %1069 = vmatprep.subr.mxu0 0.0
        %1070 = vmatpush1.msra.mxu0 0.0
        %1071 = vmatprep.subr.mxu0 0.0
        %1072 = vmatpush1.msra.mxu0 0.0
        %1073 = vmatprep.subr.mxu0 0.0
        %1074 = vmatpush1.msra.mxu0 0.0
        %1075 = vmatprep.subr.mxu0 0.0
        %1076 = vmatpush1.msra.mxu0 0.0
        %1077 = vmatprep.subr.mxu0 0.0
        %1078 = vmatpush1.msra.mxu0 0.0
        %1079 = vmatprep.subr.mxu0 0.0
        %1080 = vmatpush1.msra.mxu0 0.0
        %1081 = vmatprep.subr.mxu0 0.0
        %1082 = vmatpush1.msra.mxu0 0.0
        %1083 = vmatprep.subr.mxu0 0.0
        %1084 = vmatpush1.msra.mxu0 0.0
        %1085 = vmatprep.subr.mxu0 0.0
        %1086 = vmatpush1.msra.mxu0 0.0
        %1087 = vmatprep.subr.mxu0 0.0
        %1088 = vmatpush1.msra.mxu0 0.0
        %1089 = vmatprep.subr.mxu0 0.0
        %1090 = vmatpush1.msra.mxu0 0.0
        %1091 = vmatprep.subr.mxu0 0.0
        %1092 = vmatpush1.msra.mxu0 0.0
        %1093 = vmatprep.subr.mxu0 0.0
        %1094 = vmatpush1.msra.mxu0 0.0
        %1095 = vmatprep.subr.mxu0 0.0
        %1096 = vmatpush1.msra.mxu0 0.0
        %1097 = vmatprep.subr.mxu0 0.0
        %1098 = vmatpush1.msra.mxu0 0.0
        %1099 = vmatprep.subr.mxu0 0.0
        %1100 = vmatpush1.msra.mxu0 0.0
        %1101 = vmatprep.subr.mxu0 0.0
        %1102 = vmatpush1.msra.mxu0 0.0
        %1103 = vmatprep.subr.mxu0 0.0
        %1104 = vmatpush1.msra.mxu0 0.0
        %1105 = vmatprep.mubr.f32.mxu0 0.0
        %1106 = vmatmul.mubr.f32.gmra.mrb[0].mxu0 %v264
        %v1107 = vpop.f32.mrb[0].mxu0
        %v1108 = vadd.f32 %v228, %v1107
        %v1109 = vpop.f32.mrb[0].mxu0
        %v1110 = vadd.f32 %v228, %v1109
        %1111 = vdwg.mxu0
        %1112 = vmatprep.subr.mxu0 %v313
        %1113 = vmatpush1.msra.mxu0 %v311
        %1114 = vmatprep.subr.mxu0 0.0
        %1115 = vmatpush1.msra.mxu0 0.0
        %1116 = vmatprep.subr.mxu0 0.0
        %1117 = vmatpush1.msra.mxu0 0.0
        %1118 = vmatprep.subr.mxu0 0.0
        %1119 = vmatpush1.msra.mxu0 0.0
        %1120 = vmatprep.subr.mxu0 0.0
        %1121 = vmatpush1.msra.mxu0 0.0
        %1122 = vmatprep.subr.mxu0 0.0
        %1123 = vmatpush1.msra.mxu0 0.0
        %1124 = vmatprep.subr.mxu0 0.0
        %1125 = vmatpush1.msra.mxu0 0.0
        %1126 = vmatprep.subr.mxu0 0.0
        %1127 = vmatpush1.msra.mxu0 0.0
        %1128 = vmatprep.subr.mxu0 0.0
        %1129 = vmatpush1.msra.mxu0 0.0
        %1130 = vmatprep.subr.mxu0 0.0
        %1131 = vmatpush1.msra.mxu0 0.0
        %1132 = vmatprep.subr.mxu0 0.0
        %1133 = vmatpush1.msra.mxu0 0.0
        %1134 = vmatprep.subr.mxu0 0.0
        %1135 = vmatpush1.msra.mxu0 0.0
        %1136 = vmatprep.subr.mxu0 0.0
        %1137 = vmatpush1.msra.mxu0 0.0
        %1138 = vmatprep.subr.mxu0 0.0
        %1139 = vmatpush1.msra.mxu0 0.0
        %1140 = vmatprep.subr.mxu0 0.0
        %1141 = vmatpush1.msra.mxu0 0.0
        %1142 = vmatprep.subr.mxu0 0.0
        %1143 = vmatpush1.msra.mxu0 0.0
        %1144 = vmatprep.subr.mxu0 0.0
        %1145 = vmatpush1.msra.mxu0 0.0
        %1146 = vmatprep.subr.mxu0 0.0
        %1147 = vmatpush1.msra.mxu0 0.0
        %1148 = vmatprep.subr.mxu0 0.0
        %1149 = vmatpush1.msra.mxu0 0.0
        %1150 = vmatprep.subr.mxu0 0.0
        %1151 = vmatpush1.msra.mxu0 0.0
        %1152 = vmatprep.subr.mxu0 0.0
        %1153 = vmatpush1.msra.mxu0 0.0
        %1154 = vmatprep.subr.mxu0 0.0
        %1155 = vmatpush1.msra.mxu0 0.0
        %1156 = vmatprep.subr.mxu0 0.0
        %1157 = vmatpush1.msra.mxu0 0.0
        %1158 = vmatprep.subr.mxu0 0.0
        %1159 = vmatpush1.msra.mxu0 0.0
        %1160 = vmatprep.subr.mxu0 0.0
        %1161 = vmatpush1.msra.mxu0 0.0
        %1162 = vmatprep.subr.mxu0 0.0
        %1163 = vmatpush1.msra.mxu0 0.0
        %1164 = vmatprep.subr.mxu0 0.0
        %1165 = vmatpush1.msra.mxu0 0.0
        %1166 = vmatprep.subr.mxu0 0.0
        %1167 = vmatpush1.msra.mxu0 0.0
        %1168 = vmatprep.subr.mxu0 0.0
        %1169 = vmatpush1.msra.mxu0 0.0
        %1170 = vmatprep.subr.mxu0 0.0
        %1171 = vmatpush1.msra.mxu0 0.0
        %1172 = vmatprep.subr.mxu0 0.0
        %1173 = vmatpush1.msra.mxu0 0.0
        %1174 = vmatprep.subr.mxu0 0.0
        %1175 = vmatpush1.msra.mxu0 0.0
        %1176 = vmatprep.mubr.f32.mxu0 0.0
        %1177 = vmatmul.mubr.f32.gmra.mrb[0].mxu0 %v264
        %v1178 = vpop.f32.mrb[0].mxu0
        %v1179 = vadd.f32 %v228, %v1178
        %v1180 = vpop.f32.mrb[0].mxu0
        %v1181 = vadd.f32 %v228, %v1180
        %1182 = vdwg.mxu0
        %1183 = vmatprep.subr.mxu0 %v317
        %1184 = vmatpush1.msra.mxu0 %v315
        %1185 = vmatprep.subr.mxu0 0.0
        %1186 = vmatpush1.msra.mxu0 0.0
        %1187 = vmatprep.subr.mxu0 0.0
        %1188 = vmatpush1.msra.mxu0 0.0
        %1189 = vmatprep.subr.mxu0 0.0
        %1190 = vmatpush1.msra.mxu0 0.0
        %1191 = vmatprep.subr.mxu0 0.0
        %1192 = vmatpush1.msra.mxu0 0.0
        %1193 = vmatprep.subr.mxu0 0.0
        %1194 = vmatpush1.msra.mxu0 0.0
        %1195 = vmatprep.subr.mxu0 0.0
        %1196 = vmatpush1.msra.mxu0 0.0
        %1197 = vmatprep.subr.mxu0 0.0
        %1198 = vmatpush1.msra.mxu0 0.0
        %1199 = vmatprep.subr.mxu0 0.0
        %1200 = vmatpush1.msra.mxu0 0.0
        %1201 = vmatprep.subr.mxu0 0.0
        %1202 = vmatpush1.msra.mxu0 0.0
        %1203 = vmatprep.subr.mxu0 0.0
        %1204 = vmatpush1.msra.mxu0 0.0
        %1205 = vmatprep.subr.mxu0 0.0
        %1206 = vmatpush1.msra.mxu0 0.0
        %1207 = vmatprep.subr.mxu0 0.0
        %1208 = vmatpush1.msra.mxu0 0.0
        %1209 = vmatprep.subr.mxu0 0.0
        %1210 = vmatpush1.msra.mxu0 0.0
        %1211 = vmatprep.subr.mxu0 0.0
        %1212 = vmatpush1.msra.mxu0 0.0
        %1213 = vmatprep.subr.mxu0 0.0
        %1214 = vmatpush1.msra.mxu0 0.0
        %1215 = vmatprep.subr.mxu0 0.0
        %1216 = vmatpush1.msra.mxu0 0.0
        %1217 = vmatprep.subr.mxu0 0.0
        %1218 = vmatpush1.msra.mxu0 0.0
        %1219 = vmatprep.subr.mxu0 0.0
        %1220 = vmatpush1.msra.mxu0 0.0
        %1221 = vmatprep.subr.mxu0 0.0
        %1222 = vmatpush1.msra.mxu0 0.0
        %1223 = vmatprep.subr.mxu0 0.0
        %1224 = vmatpush1.msra.mxu0 0.0
        %1225 = vmatprep.subr.mxu0 0.0
        %1226 = vmatpush1.msra.mxu0 0.0
        %1227 = vmatprep.subr.mxu0 0.0
        %1228 = vmatpush1.msra.mxu0 0.0
        %1229 = vmatprep.subr.mxu0 0.0
        %1230 = vmatpush1.msra.mxu0 0.0
        %1231 = vmatprep.subr.mxu0 0.0
        %1232 = vmatpush1.msra.mxu0 0.0
        %1233 = vmatprep.subr.mxu0 0.0
        %1234 = vmatpush1.msra.mxu0 0.0
        %1235 = vmatprep.subr.mxu0 0.0
        %1236 = vmatpush1.msra.mxu0 0.0
        %1237 = vmatprep.subr.mxu0 0.0
        %1238 = vmatpush1.msra.mxu0 0.0
        %1239 = vmatprep.subr.mxu0 0.0
        %1240 = vmatpush1.msra.mxu0 0.0
        %1241 = vmatprep.subr.mxu0 0.0
        %1242 = vmatpush1.msra.mxu0 0.0
        %1243 = vmatprep.subr.mxu0 0.0
        %1244 = vmatpush1.msra.mxu0 0.0
        %1245 = vmatprep.subr.mxu0 0.0
        %1246 = vmatpush1.msra.mxu0 0.0
        %1247 = vmatprep.mubr.f32.mxu0 0.0
        %1248 = vmatmul.mubr.f32.gmra.mrb[0].mxu0 %v264
        %v1249 = vpop.f32.mrb[0].mxu0
        %v1250 = vadd.f32 %v228, %v1249
        %v1251 = vpop.f32.mrb[0].mxu0
        %v1252 = vadd.f32 %v228, %v1251
        %1253 = vdwg.mxu0
        %1254 = vmatprep.subr.mxu0 %v321
        %1255 = vmatpush1.msra.mxu0 %v319
        %1256 = vmatprep.subr.mxu0 0.0
        %1257 = vmatpush1.msra.mxu0 0.0
        %1258 = vmatprep.subr.mxu0 0.0
        %1259 = vmatpush1.msra.mxu0 0.0
        %1260 = vmatprep.subr.mxu0 0.0
        %1261 = vmatpush1.msra.mxu0 0.0
        %1262 = vmatprep.subr.mxu0 0.0
        %1263 = vmatpush1.msra.mxu0 0.0
        %1264 = vmatprep.subr.mxu0 0.0
        %1265 = vmatpush1.msra.mxu0 0.0
        %1266 = vmatprep.subr.mxu0 0.0
        %1267 = vmatpush1.msra.mxu0 0.0
        %1268 = vmatprep.subr.mxu0 0.0
        %1269 = vmatpush1.msra.mxu0 0.0
        %1270 = vmatprep.subr.mxu0 0.0
        %1271 = vmatpush1.msra.mxu0 0.0
        %1272 = vmatprep.subr.mxu0 0.0
        %1273 = vmatpush1.msra.mxu0 0.0
        %1274 = vmatprep.subr.mxu0 0.0
        %1275 = vmatpush1.msra.mxu0 0.0
        %1276 = vmatprep.subr.mxu0 0.0
        %1277 = vmatpush1.msra.mxu0 0.0
        %1278 = vmatprep.subr.mxu0 0.0
        %1279 = vmatpush1.msra.mxu0 0.0
        %1280 = vmatprep.subr.mxu0 0.0
        %1281 = vmatpush1.msra.mxu0 0.0
        %1282 = vmatprep.subr.mxu0 0.0
        %1283 = vmatpush1.msra.mxu0 0.0
        %1284 = vmatprep.subr.mxu0 0.0
        %1285 = vmatpush1.msra.mxu0 0.0
        %1286 = vmatprep.subr.mxu0 0.0
        %1287 = vmatpush1.msra.mxu0 0.0
        %1288 = vmatprep.subr.mxu0 0.0
        %1289 = vmatpush1.msra.mxu0 0.0
        %1290 = vmatprep.subr.mxu0 0.0
        %1291 = vmatpush1.msra.mxu0 0.0
        %1292 = vmatprep.subr.mxu0 0.0
        %1293 = vmatpush1.msra.mxu0 0.0
        %1294 = vmatprep.subr.mxu0 0.0
        %1295 = vmatpush1.msra.mxu0 0.0
        %1296 = vmatprep.subr.mxu0 0.0
        %1297 = vmatpush1.msra.mxu0 0.0
        %1298 = vmatprep.subr.mxu0 0.0
        %1299 = vmatpush1.msra.mxu0 0.0
        %1300 = vmatprep.subr.mxu0 0.0
        %1301 = vmatpush1.msra.mxu0 0.0
        %1302 = vmatprep.subr.mxu0 0.0
        %1303 = vmatpush1.msra.mxu0 0.0
        %1304 = vmatprep.subr.mxu0 0.0
        %1305 = vmatpush1.msra.mxu0 0.0
        %1306 = vmatprep.subr.mxu0 0.0
        %1307 = vmatpush1.msra.mxu0 0.0
        %1308 = vmatprep.subr.mxu0 0.0
        %1309 = vmatpush1.msra.mxu0 0.0
        %1310 = vmatprep.subr.mxu0 0.0
        %1311 = vmatpush1.msra.mxu0 0.0
        %1312 = vmatprep.subr.mxu0 0.0
        %1313 = vmatpush1.msra.mxu0 0.0
        %1314 = vmatprep.subr.mxu0 0.0
        %1315 = vmatpush1.msra.mxu0 0.0
        %1316 = vmatprep.subr.mxu0 0.0
        %1317 = vmatpush1.msra.mxu0 0.0
        %1318 = vmatprep.mubr.f32.mxu0 0.0
        %1319 = vmatmul.mubr.f32.gmra.mrb[0].mxu0 %v264
        %v1320 = vpop.f32.mrb[0].mxu0
        %v1321 = vadd.f32 %v228, %v1320
        %v1322 = vpop.f32.mrb[0].mxu0
        %v1323 = vadd.f32 %v228, %v1322
        %1324 = vdwg.mxu0
        %1325 = vmatprep.subr.mxu0 %v325
        %1326 = vmatpush1.msra.mxu0 %v323
        %1327 = vmatprep.subr.mxu0 0.0
        %1328 = vmatpush1.msra.mxu0 0.0
        %1329 = vmatprep.subr.mxu0 0.0
        %1330 = vmatpush1.msra.mxu0 0.0
        %1331 = vmatprep.subr.mxu0 0.0
        %1332 = vmatpush1.msra.mxu0 0.0
        %1333 = vmatprep.subr.mxu0 0.0
        %1334 = vmatpush1.msra.mxu0 0.0
        %1335 = vmatprep.subr.mxu0 0.0
        %1336 = vmatpush1.msra.mxu0 0.0
        %1337 = vmatprep.subr.mxu0 0.0
        %1338 = vmatpush1.msra.mxu0 0.0
        %1339 = vmatprep.subr.mxu0 0.0
        %1340 = vmatpush1.msra.mxu0 0.0
        %1341 = vmatprep.subr.mxu0 0.0
        %1342 = vmatpush1.msra.mxu0 0.0
        %1343 = vmatprep.subr.mxu0 0.0
        %1344 = vmatpush1.msra.mxu0 0.0
        %1345 = vmatprep.subr.mxu0 0.0
        %1346 = vmatpush1.msra.mxu0 0.0
        %1347 = vmatprep.subr.mxu0 0.0
        %1348 = vmatpush1.msra.mxu0 0.0
        %1349 = vmatprep.subr.mxu0 0.0
        %1350 = vmatpush1.msra.mxu0 0.0
        %1351 = vmatprep.subr.mxu0 0.0
        %1352 = vmatpush1.msra.mxu0 0.0
        %1353 = vmatprep.subr.mxu0 0.0
        %1354 = vmatpush1.msra.mxu0 0.0
        %1355 = vmatprep.subr.mxu0 0.0
        %1356 = vmatpush1.msra.mxu0 0.0
        %1357 = vmatprep.subr.mxu0 0.0
        %1358 = vmatpush1.msra.mxu0 0.0
        %1359 = vmatprep.subr.mxu0 0.0
        %1360 = vmatpush1.msra.mxu0 0.0
        %1361 = vmatprep.subr.mxu0 0.0
        %1362 = vmatpush1.msra.mxu0 0.0
        %1363 = vmatprep.subr.mxu0 0.0
        %1364 = vmatpush1.msra.mxu0 0.0
        %1365 = vmatprep.subr.mxu0 0.0
        %1366 = vmatpush1.msra.mxu0 0.0
        %1367 = vmatprep.subr.mxu0 0.0
        %1368 = vmatpush1.msra.mxu0 0.0
        %1369 = vmatprep.subr.mxu0 0.0
        %1370 = vmatpush1.msra.mxu0 0.0
        %1371 = vmatprep.subr.mxu0 0.0
        %1372 = vmatpush1.msra.mxu0 0.0
        %1373 = vmatprep.subr.mxu0 0.0
        %1374 = vmatpush1.msra.mxu0 0.0
        %1375 = vmatprep.subr.mxu0 0.0
        %1376 = vmatpush1.msra.mxu0 0.0
        %1377 = vmatprep.subr.mxu0 0.0
        %1378 = vmatpush1.msra.mxu0 0.0
        %1379 = vmatprep.subr.mxu0 0.0
        %1380 = vmatpush1.msra.mxu0 0.0
        %1381 = vmatprep.subr.mxu0 0.0
        %1382 = vmatpush1.msra.mxu0 0.0
        %1383 = vmatprep.subr.mxu0 0.0
        %1384 = vmatpush1.msra.mxu0 0.0
        %1385 = vmatprep.subr.mxu0 0.0
        %1386 = vmatpush1.msra.mxu0 0.0
        %1387 = vmatprep.subr.mxu0 0.0
        %1388 = vmatpush1.msra.mxu0 0.0
        %1389 = vmatprep.mubr.f32.mxu0 0.0
        %1390 = vmatmul.mubr.f32.gmra.mrb[0].mxu0 %v264
        %v1391 = vpop.f32.mrb[0].mxu0
        %v1392 = vadd.f32 %v228, %v1391
        %v1393 = vpop.f32.mrb[0].mxu0
        %v1394 = vadd.f32 %v228, %v1393
        %1395 = vdwg.mxu0
        %1396 = vmatprep.subr.mxu0 %v329
        %1397 = vmatpush1.msra.mxu0 %v327
        %1398 = vmatprep.subr.mxu0 0.0
        %1399 = vmatpush1.msra.mxu0 0.0
        %1400 = vmatprep.subr.mxu0 0.0
        %1401 = vmatpush1.msra.mxu0 0.0
        %1402 = vmatprep.subr.mxu0 0.0
        %1403 = vmatpush1.msra.mxu0 0.0
        %1404 = vmatprep.subr.mxu0 0.0
        %1405 = vmatpush1.msra.mxu0 0.0
        %1406 = vmatprep.subr.mxu0 0.0
        %1407 = vmatpush1.msra.mxu0 0.0
        %1408 = vmatprep.subr.mxu0 0.0
        %1409 = vmatpush1.msra.mxu0 0.0
        %1410 = vmatprep.subr.mxu0 0.0
        %1411 = vmatpush1.msra.mxu0 0.0
        %1412 = vmatprep.subr.mxu0 0.0
        %1413 = vmatpush1.msra.mxu0 0.0
        %1414 = vmatprep.subr.mxu0 0.0
        %1415 = vmatpush1.msra.mxu0 0.0
        %1416 = vmatprep.subr.mxu0 0.0
        %1417 = vmatpush1.msra.mxu0 0.0
        %1418 = vmatprep.subr.mxu0 0.0
        %1419 = vmatpush1.msra.mxu0 0.0
        %1420 = vmatprep.subr.mxu0 0.0
        %1421 = vmatpush1.msra.mxu0 0.0
        %1422 = vmatprep.subr.mxu0 0.0
        %1423 = vmatpush1.msra.mxu0 0.0
        %1424 = vmatprep.subr.mxu0 0.0
        %1425 = vmatpush1.msra.mxu0 0.0
        %1426 = vmatprep.subr.mxu0 0.0
        %1427 = vmatpush1.msra.mxu0 0.0
        %1428 = vmatprep.subr.mxu0 0.0
        %1429 = vmatpush1.msra.mxu0 0.0
        %1430 = vmatprep.subr.mxu0 0.0
        %1431 = vmatpush1.msra.mxu0 0.0
        %1432 = vmatprep.subr.mxu0 0.0
        %1433 = vmatpush1.msra.mxu0 0.0
        %1434 = vmatprep.subr.mxu0 0.0
        %1435 = vmatpush1.msra.mxu0 0.0
        %1436 = vmatprep.subr.mxu0 0.0
        %1437 = vmatpush1.msra.mxu0 0.0
        %1438 = vmatprep.subr.mxu0 0.0
        %1439 = vmatpush1.msra.mxu0 0.0
        %1440 = vmatprep.subr.mxu0 0.0
        %1441 = vmatpush1.msra.mxu0 0.0
        %1442 = vmatprep.subr.mxu0 0.0
        %1443 = vmatpush1.msra.mxu0 0.0
        %1444 = vmatprep.subr.mxu0 0.0
        %1445 = vmatpush1.msra.mxu0 0.0
        %1446 = vmatprep.subr.mxu0 0.0
        %1447 = vmatpush1.msra.mxu0 0.0
        %1448 = vmatprep.subr.mxu0 0.0
        %1449 = vmatpush1.msra.mxu0 0.0
        %1450 = vmatprep.subr.mxu0 0.0
        %1451 = vmatpush1.msra.mxu0 0.0
        %1452 = vmatprep.subr.mxu0 0.0
        %1453 = vmatpush1.msra.mxu0 0.0
        %1454 = vmatprep.subr.mxu0 0.0
        %1455 = vmatpush1.msra.mxu0 0.0
        %1456 = vmatprep.subr.mxu0 0.0
        %1457 = vmatpush1.msra.mxu0 0.0
        %1458 = vmatprep.subr.mxu0 0.0
        %1459 = vmatpush1.msra.mxu0 0.0
        %1460 = vmatprep.mubr.f32.mxu0 0.0
        %1461 = vmatmul.mubr.f32.gmra.mrb[0].mxu0 %v264
        %v1462 = vpop.f32.mrb[0].mxu0
        %v1463 = vadd.f32 %v228, %v1462
        %v1464 = vpop.f32.mrb[0].mxu0
        %v1465 = vadd.f32 %v228, %v1464
        %1466 = vdwg.mxu0
        %v1467 = vxor.u32 %v398, 2147483648
        %v1468 = vxor.u32 %v400, 2147483648
        %v1469 = vxor.u32 %v469, 2147483648
        %v1470 = vxor.u32 %v471, 2147483648
        %v1471 = vxor.u32 %v540, 2147483648
        %v1472 = vxor.u32 %v542, 2147483648
        %v1473 = vxor.u32 %v611, 2147483648
        %v1474 = vxor.u32 %v613, 2147483648
        %v1475 = vxor.u32 %v682, 2147483648
        %v1476 = vxor.u32 %v684, 2147483648
        %v1477 = vxor.u32 %v753, 2147483648
        %v1478 = vxor.u32 %v755, 2147483648
        %v1479 = vxor.u32 %v824, 2147483648
        %v1480 = vxor.u32 %v826, 2147483648
        %v1481 = vxor.u32 %v895, 2147483648
        %v1482 = vxor.u32 %v897, 2147483648
        %v1483 = vxor.u32 %v966, 2147483648
        %v1484 = vxor.u32 %v968, 2147483648
        %v1485 = vxor.u32 %v1037, 2147483648
        %v1486 = vxor.u32 %v1039, 2147483648
        %v1487 = vxor.u32 %v1108, 2147483648
        %v1488 = vxor.u32 %v1110, 2147483648
        %v1489 = vxor.u32 %v1179, 2147483648
        %v1490 = vxor.u32 %v1181, 2147483648
        %v1491 = vxor.u32 %v1250, 2147483648
        %v1492 = vxor.u32 %v1252, 2147483648
        %v1493 = vxor.u32 %v1321, 2147483648
        %v1494 = vxor.u32 %v1323, 2147483648
        %v1495 = vxor.u32 %v1392, 2147483648
        %v1496 = vxor.u32 %v1394, 2147483648
        %v1497 = vxor.u32 %v1463, 2147483648
        %v1498 = vxor.u32 %v1465, 2147483648
        %v1499 = vmul.f32 %v1467, 1.442695
        %v1500 = vpow.pop %v1499
        %v1501 = vmul.f32 %v1468, 1.442695
        %v1502 = vpow.pop %v1501
        %v1503 = vmul.f32 %v1469, 1.442695
        %v1504 = vpow.pop %v1503
        %v1505 = vmul.f32 %v1470, 1.442695
        %v1506 = vpow.pop %v1505
        %v1507 = vmul.f32 %v1471, 1.442695
        %v1508 = vpow.pop %v1507
        %v1509 = vmul.f32 %v1472, 1.442695
        %v1510 = vpow.pop %v1509
        %v1511 = vmul.f32 %v1473, 1.442695
        %v1512 = vpow.pop %v1511
        %v1513 = vmul.f32 %v1474, 1.442695
        %v1514 = vpow.pop %v1513
        %v1515 = vmul.f32 %v1475, 1.442695
        %v1516 = vpow.pop %v1515
        %v1517 = vmul.f32 %v1476, 1.442695
        %v1518 = vpow.pop %v1517
        %v1519 = vmul.f32 %v1477, 1.442695
        %v1520 = vpow.pop %v1519
        %v1521 = vmul.f32 %v1478, 1.442695
        %v1522 = vpow.pop %v1521
        %v1523 = vmul.f32 %v1479, 1.442695
        %v1524 = vpow.pop %v1523
        %v1525 = vmul.f32 %v1480, 1.442695
        %v1526 = vpow.pop %v1525
        %v1527 = vmul.f32 %v1481, 1.442695
        %v1528 = vpow.pop %v1527
        %v1529 = vmul.f32 %v1482, 1.442695
        %v1530 = vpow.pop %v1529
        %v1531 = vmul.f32 %v1483, 1.442695
        %v1532 = vpow.pop %v1531
        %v1533 = vmul.f32 %v1484, 1.442695
        %v1534 = vpow.pop %v1533
        %v1535 = vmul.f32 %v1485, 1.442695
        %v1536 = vpow.pop %v1535
        %v1537 = vmul.f32 %v1486, 1.442695
        %v1538 = vpow.pop %v1537
        %v1539 = vmul.f32 %v1487, 1.442695
        %v1540 = vpow.pop %v1539
        %v1541 = vmul.f32 %v1488, 1.442695
        %v1542 = vpow.pop %v1541
        %v1543 = vmul.f32 %v1489, 1.442695
        %v1544 = vpow.pop %v1543
        %v1545 = vmul.f32 %v1490, 1.442695
        %v1546 = vpow.pop %v1545
        %v1547 = vmul.f32 %v1491, 1.442695
        %v1548 = vpow.pop %v1547
        %v1549 = vmul.f32 %v1492, 1.442695
        %v1550 = vpow.pop %v1549
        %v1551 = vmul.f32 %v1493, 1.442695
        %v1552 = vpow.pop %v1551
        %v1553 = vmul.f32 %v1494, 1.442695
        %v1554 = vpow.pop %v1553
        %v1555 = vmul.f32 %v1495, 1.442695
        %v1556 = vpow.pop %v1555
        %v1557 = vmul.f32 %v1496, 1.442695
        %v1558 = vpow.pop %v1557
        %v1559 = vmul.f32 %v1497, 1.442695
        %v1560 = vpow.pop %v1559
        %v1561 = vmul.f32 %v1498, 1.442695
        %v1562 = vpow.pop %v1561
        %v1563 = vadd.f32 %v1500, 1.0
        %v1564 = vadd.f32 %v1502, 1.0
        %v1565 = vadd.f32 %v1504, 1.0
        %v1566 = vadd.f32 %v1506, 1.0
        %v1567 = vadd.f32 %v1508, 1.0
        %v1568 = vadd.f32 %v1510, 1.0
        %v1569 = vadd.f32 %v1512, 1.0
        %v1570 = vadd.f32 %v1514, 1.0
        %v1571 = vadd.f32 %v1516, 1.0
        %v1572 = vadd.f32 %v1518, 1.0
        %v1573 = vadd.f32 %v1520, 1.0
        %v1574 = vadd.f32 %v1522, 1.0
        %v1575 = vadd.f32 %v1524, 1.0
        %v1576 = vadd.f32 %v1526, 1.0
        %v1577 = vadd.f32 %v1528, 1.0
        %v1578 = vadd.f32 %v1530, 1.0
        %v1579 = vadd.f32 %v1532, 1.0
        %v1580 = vadd.f32 %v1534, 1.0
        %v1581 = vadd.f32 %v1536, 1.0
        %v1582 = vadd.f32 %v1538, 1.0
        %v1583 = vadd.f32 %v1540, 1.0
        %v1584 = vadd.f32 %v1542, 1.0
        %v1585 = vadd.f32 %v1544, 1.0
        %v1586 = vadd.f32 %v1546, 1.0
        %v1587 = vadd.f32 %v1548, 1.0
        %v1588 = vadd.f32 %v1550, 1.0
        %v1589 = vadd.f32 %v1552, 1.0
        %v1590 = vadd.f32 %v1554, 1.0
        %v1591 = vadd.f32 %v1556, 1.0
        %v1592 = vadd.f32 %v1558, 1.0
        %v1593 = vadd.f32 %v1560, 1.0
        %v1594 = vadd.f32 %v1562, 1.0
        %v1595 = vrcp.pop %v1563
        %v1596 = vmul.f32 1.0, %v1595
        %v1597 = vrcp.pop %v1564
        %v1598 = vmul.f32 1.0, %v1597
        %v1599 = vrcp.pop %v1565
        %v1600 = vmul.f32 1.0, %v1599
        %v1601 = vrcp.pop %v1566
        %v1602 = vmul.f32 1.0, %v1601
        %v1603 = vrcp.pop %v1567
        %v1604 = vmul.f32 1.0, %v1603
        %v1605 = vrcp.pop %v1568
        %v1606 = vmul.f32 1.0, %v1605
        %v1607 = vrcp.pop %v1569
        %v1608 = vmul.f32 1.0, %v1607
        %v1609 = vrcp.pop %v1570
        %v1610 = vmul.f32 1.0, %v1609
        %v1611 = vrcp.pop %v1571
        %v1612 = vmul.f32 1.0, %v1611
        %v1613 = vrcp.pop %v1572
        %v1614 = vmul.f32 1.0, %v1613
        %v1615 = vrcp.pop %v1573
        %v1616 = vmul.f32 1.0, %v1615
        %v1617 = vrcp.pop %v1574
        %v1618 = vmul.f32 1.0, %v1617
        %v1619 = vrcp.pop %v1575
        %v1620 = vmul.f32 1.0, %v1619
        %v1621 = vrcp.pop %v1576
        %v1622 = vmul.f32 1.0, %v1621
        %v1623 = vrcp.pop %v1577
        %v1624 = vmul.f32 1.0, %v1623
        %v1625 = vrcp.pop %v1578
        %v1626 = vmul.f32 1.0, %v1625
        %v1627 = vrcp.pop %v1579
        %v1628 = vmul.f32 1.0, %v1627
        %v1629 = vrcp.pop %v1580
        %v1630 = vmul.f32 1.0, %v1629
        %v1631 = vrcp.pop %v1581
        %v1632 = vmul.f32 1.0, %v1631
        %v1633 = vrcp.pop %v1582
        %v1634 = vmul.f32 1.0, %v1633
        %v1635 = vrcp.pop %v1583
        %v1636 = vmul.f32 1.0, %v1635
        %v1637 = vrcp.pop %v1584
        %v1638 = vmul.f32 1.0, %v1637
        %v1639 = vrcp.pop %v1585
        %v1640 = vmul.f32 1.0, %v1639
        %v1641 = vrcp.pop %v1586
        %v1642 = vmul.f32 1.0, %v1641
        %v1643 = vrcp.pop %v1587
        %v1644 = vmul.f32 1.0, %v1643
        %v1645 = vrcp.pop %v1588
        %v1646 = vmul.f32 1.0, %v1645
        %v1647 = vrcp.pop %v1589
        %v1648 = vmul.f32 1.0, %v1647
        %v1649 = vrcp.pop %v1590
        %v1650 = vmul.f32 1.0, %v1649
        %v1651 = vrcp.pop %v1591
        %v1652 = vmul.f32 1.0, %v1651
        %v1653 = vrcp.pop %v1592
        %v1654 = vmul.f32 1.0, %v1653
        %v1655 = vrcp.pop %v1593
        %v1656 = vmul.f32 1.0, %v1655
        %v1657 = vrcp.pop %v1594
        %v1658 = vmul.f32 1.0, %v1657
        %v1691 = vcombine.low %v1596, %v1598
        %v1692 = vcombine.low %v1600, %v1602
        %v1694 = vunpack.c.l.s4 1983009808
        %v1695 = vunpack.c.0.s8 %v1694
        %v1696 = vlaneseq
        %v1697 = vshrl.u32 %v1696, 7
        %v1698 = vsub.s32 %v1695, %v1697
        %v1699 = vrot.slane %v1691, %v1698
        %v1701 = vunpack.c.l.s4 1983009808
        %v1702 = vunpack.c.0.s8 %v1701
        %v1703 = vlaneseq
        %v1704 = vshrl.u32 %v1703, 7
        %v1705 = vsub.s32 %v1702, %v1704
        %v1706 = vrot.slane %v1692, %v1705
        %v1707 = vcombine.low %v1699, %v1706
        %v1708 = vcombine.low %v1604, %v1606
        %v1709 = vcombine.low %v1608, %v1610
        %v1711 = vunpack.c.l.s4 1983009808
        %v1712 = vunpack.c.0.s8 %v1711
        %v1713 = vlaneseq
        %v1714 = vshrl.u32 %v1713, 7
        %v1715 = vsub.s32 %v1712, %v1714
        %v1716 = vrot.slane %v1708, %v1715
        %v1718 = vunpack.c.l.s4 1983009808
        %v1719 = vunpack.c.0.s8 %v1718
        %v1720 = vlaneseq
        %v1721 = vshrl.u32 %v1720, 7
        %v1722 = vsub.s32 %v1719, %v1721
        %v1723 = vrot.slane %v1709, %v1722
        %v1724 = vcombine.low %v1716, %v1723
        %v1725 = vcombine.low %v1612, %v1614
        %v1726 = vcombine.low %v1616, %v1618
        %v1728 = vunpack.c.l.s4 1983009808
        %v1729 = vunpack.c.0.s8 %v1728
        %v1730 = vlaneseq
        %v1731 = vshrl.u32 %v1730, 7
        %v1732 = vsub.s32 %v1729, %v1731
        %v1733 = vrot.slane %v1725, %v1732
        %v1735 = vunpack.c.l.s4 1983009808
        %v1736 = vunpack.c.0.s8 %v1735
        %v1737 = vlaneseq
        %v1738 = vshrl.u32 %v1737, 7
        %v1739 = vsub.s32 %v1736, %v1738
        %v1740 = vrot.slane %v1726, %v1739
        %v1741 = vcombine.low %v1733, %v1740
        %v1742 = vcombine.low %v1620, %v1622
        %v1743 = vcombine.low %v1624, %v1626
        %v1745 = vunpack.c.l.s4 1983009808
        %v1746 = vunpack.c.0.s8 %v1745
        %v1747 = vlaneseq
        %v1748 = vshrl.u32 %v1747, 7
        %v1749 = vsub.s32 %v1746, %v1748
        %v1750 = vrot.slane %v1742, %v1749
        %v1752 = vunpack.c.l.s4 1983009808
        %v1753 = vunpack.c.0.s8 %v1752
        %v1754 = vlaneseq
        %v1755 = vshrl.u32 %v1754, 7
        %v1756 = vsub.s32 %v1753, %v1755
        %v1757 = vrot.slane %v1743, %v1756
        %v1758 = vcombine.low %v1750, %v1757
        %v1759 = vcombine.low %v1628, %v1630
        %v1760 = vcombine.low %v1632, %v1634
        %v1762 = vunpack.c.l.s4 1983009808
        %v1763 = vunpack.c.0.s8 %v1762
        %v1764 = vlaneseq
        %v1765 = vshrl.u32 %v1764, 7
        %v1766 = vsub.s32 %v1763, %v1765
        %v1767 = vrot.slane %v1759, %v1766
        %v1769 = vunpack.c.l.s4 1983009808
        %v1770 = vunpack.c.0.s8 %v1769
        %v1771 = vlaneseq
        %v1772 = vshrl.u32 %v1771, 7
        %v1773 = vsub.s32 %v1770, %v1772
        %v1774 = vrot.slane %v1760, %v1773
        %v1775 = vcombine.low %v1767, %v1774
        %v1776 = vcombine.low %v1636, %v1638
        %v1777 = vcombine.low %v1640, %v1642
        %v1779 = vunpack.c.l.s4 1983009808
        %v1780 = vunpack.c.0.s8 %v1779
        %v1781 = vlaneseq
        %v1782 = vshrl.u32 %v1781, 7
        %v1783 = vsub.s32 %v1780, %v1782
        %v1784 = vrot.slane %v1776, %v1783
        %v1786 = vunpack.c.l.s4 1983009808
        %v1787 = vunpack.c.0.s8 %v1786
        %v1788 = vlaneseq
        %v1789 = vshrl.u32 %v1788, 7
        %v1790 = vsub.s32 %v1787, %v1789
        %v1791 = vrot.slane %v1777, %v1790
        %v1792 = vcombine.low %v1784, %v1791
        %v1793 = vcombine.low %v1644, %v1646
        %v1794 = vcombine.low %v1648, %v1650
        %v1796 = vunpack.c.l.s4 1983009808
        %v1797 = vunpack.c.0.s8 %v1796
        %v1798 = vlaneseq
        %v1799 = vshrl.u32 %v1798, 7
        %v1800 = vsub.s32 %v1797, %v1799
        %v1801 = vrot.slane %v1793, %v1800
        %v1803 = vunpack.c.l.s4 1983009808
        %v1804 = vunpack.c.0.s8 %v1803
        %v1805 = vlaneseq
        %v1806 = vshrl.u32 %v1805, 7
        %v1807 = vsub.s32 %v1804, %v1806
        %v1808 = vrot.slane %v1794, %v1807
        %v1809 = vcombine.low %v1801, %v1808
        %v1810 = vcombine.low %v1652, %v1654
        %v1811 = vcombine.low %v1656, %v1658
        %v1813 = vunpack.c.l.s4 1983009808
        %v1814 = vunpack.c.0.s8 %v1813
        %v1815 = vlaneseq
        %v1816 = vshrl.u32 %v1815, 7
        %v1817 = vsub.s32 %v1814, %v1816
        %v1818 = vrot.slane %v1810, %v1817
        %v1820 = vunpack.c.l.s4 1983009808
        %v1821 = vunpack.c.0.s8 %v1820
        %v1822 = vlaneseq
        %v1823 = vshrl.u32 %v1822, 7
        %v1824 = vsub.s32 %v1821, %v1823
        %v1825 = vrot.slane %v1811, %v1824
        %v1826 = vcombine.low %v1818, %v1825
        %1835 = vst [vmem:[%s204] sm:$0xff] %v1707
        %1836 = vst [vmem:[%s204 + $0x8] sm:$0xff] %v1724
        %1837 = vst [vmem:[%s204 + $0x10] sm:$0xff] %v1741
        %1838 = vst [vmem:[%s204 + $0x18] sm:$0xff] %v1758
        %1839 = vst [vmem:[%s204 + $0x20] sm:$0xff] %v1775
        %1840 = vst [vmem:[%s204 + $0x28] sm:$0xff] %v1792
        %1841 = vst [vmem:[%s204 + $0x30] sm:$0xff] %v1809
        %1842 = vst [vmem:[%s204 + $0x38] sm:$0xff] %v1826
        %s1843 = sand.u32 %s112, 1
        %s1844 = scalar_lea.sflag [#allocation4], %s1843
        %s1845 = sand.u32 %s112, 1
        %s1846 = smul.addr %s1845, 64
        %s1847 = scalar_lea.vmem [#allocation5], %s1846
        // Predicated region
        $region37: #{tpu_custom_call.1} parent=31 // pred_check
          %p1848 = pneg %p122
        $region38: #{tpu_custom_call.1} parent=31 // pred_check_branch
          %1850 = sbr.rel (%p1848) target = $region40
        $region39: #{tpu_custom_call.1} parent=31 // pred_region
          %s1851 = smul.u32 32, %s25
          %s1853 = ssub.s32 1024, 1024
          %1854 = vsyncadd %s1844, %s1853
          %s1855 = smul.addr %s24, 32
          %s1856 = sadd.s32 %s1851, %s1855
          %s1857 = smul.addr %s1856, 32
          %s1858 = scalar_lea.hbm %s3, %s1857
          %s1860 = sshll.u32 %s1847, 4
          %s1861 = int_to_ptr.vmem [resolvable:$true] %s1860
          %1863 = dma.vmem_to_hbm [thread:$0]  %s1861, 1024, %s1858, %s1844
        $region40: #{tpu_custom_call.1} parent=31 // pred_fallthru
          _
      $region32: #{tpu_custom_call.1} parent=5 // pred_fallthru
        _
      %p1864 = scmp.le.s32.totalorder 2, %s15
      // Predicated region
      $region41: #{tpu_custom_call.1} parent=5 // pred_check
        %p1865 = pneg %p1864
      $region42: #{tpu_custom_call.1} parent=5 // pred_check_branch
        %1867 = sbr.rel (%p1865) target = $region44
      $region43: #{tpu_custom_call.1} parent=5 // pred_region
        %s1868 = ssub.s32 %s15, 2
        // Predicated region
        $region45: #{tpu_custom_call.1} parent=43 // pred_check
          %p1869 = pneg %p128
        $region46: #{tpu_custom_call.1} parent=43 // pred_check_branch
          %1871 = sbr.rel (%p1869) target = $region48
        $region47: #{tpu_custom_call.1} parent=43 // pred_region
          %s1872 = sand.u32 %s113, 1
          %s1873 = scalar_lea.sflag [#allocation4], %s1872
          %s1874 = sand.u32 %s113, 1
          %s1875 = smul.addr %s1874, 64
          %s1876 = scalar_lea.vmem [#allocation5], %s1875
          %1877 = dma.done %s1873, 1024
        $region48: #{tpu_custom_call.1} parent=43 // pred_fallthru
          _
      $region44: #{tpu_custom_call.1} parent=5 // pred_fallthru
        _
    $region6: #{tpu_custom_call.1} parent=1 // loop_footer
      %s19 = sadd.s32 1, %s15
    $region7: #{tpu_custom_call.1} parent=1 // loop_footer_branch
      %14 = sbr.rel target = $region3
    $region8: #{tpu_custom_call.1} parent=1 // loop_exit
      _
    %1878 = vsyncpa [#allocation3], 1
    %s1879 = scalar_lea.sflag [#allocation3], 1
    %1880 = vsyncpa %s1879, 1
    %1881 = vsyncpa [#allocation4], 1
    %s1882 = scalar_lea.sflag [#allocation4], 1
    %1883 = vsyncpa %s1882, 1

</llo_original>
